<compile_context>
chip_gen: v7x
topology: tpu7x:2x2x1
jax: 0.10.0
libtpu: 0.0.40
codegen_flags: <defaults>
</compile_context>

<pallas_src>
import functools

import numpy as np
import jax
import jax.numpy as jnp
from jax.experimental import pallas as pl
from jax.experimental.pallas import tpu as pltpu

# -----------------------------------------------------------------------------
# Synthetic "configer" values (module has no learnable parameters).
# -----------------------------------------------------------------------------
CONFIG = dict(
    temperature=0.1,
    base_temperature=0.07,
    max_samples=64,
    max_views=4,
    loss_weight=0.1,          # contrast loss weight (only used if with_embed=True)
    ignore_index=-1,
    seg_loss_weight=1.0,      # FSAuxCELoss main-branch weight
    aux_loss_weight=0.4,      # FSAuxCELoss aux-branch weight
)
# TODO(synk): FSAuxCELoss source was not provided; the standard openseg
# formulation (weighted sum of plain CE on main + aux heads) is used here.

_PAD_LABEL = -2               # sentinel for padded anchors in the contrastive kernel


# -----------------------------------------------------------------------------
# Bilinear interpolation matrix (align_corners=True): (out_size, in_size)
# -----------------------------------------------------------------------------
def _bilinear_matrix(in_size, out_size):
    if out_size == 1:
        src = jnp.zeros((1,), jnp.float32)
    else:
        src = jnp.arange(out_size, dtype=jnp.float32) * (in_size - 1) / (out_size - 1)
    i0 = jnp.clip(jnp.floor(src).astype(jnp.int32), 0, in_size - 1)
    i1 = jnp.clip(i0 + 1, 0, in_size - 1)
    w1 = src - i0.astype(jnp.float32)
    w0 = 1.0 - w1
    return (jax.nn.one_hot(i0, in_size, dtype=jnp.float32) * w0[:, None]
            + jax.nn.one_hot(i1, in_size, dtype=jnp.float32) * w1[:, None])


# -----------------------------------------------------------------------------
# Kernel 1: fused bilinear upsample (main + aux heads) + masked cross-entropy
# -----------------------------------------------------------------------------
def _fused_upsample_ce_kernel(seg_ref, aux_ref, wr_ref, wct_ref, tgt_ref,
                              out_ref,
                              colres_main, colres_aux, sum_main, sum_aux, cnt,
                              *, num_classes, h_in, ignore_index):
    it = pl.program_id(1)

    # --- per-image init: hoisted column resize (once per image, reused by every
    #     row tile) + accumulator reset.  The head blocks' block index only
    #     depends on n, so Pallas does not re-DMA them for it > 0 either.
    @pl.when(it == 0)
    def _():
        wct = wct_ref[...]                                        # (Ws, Wt_pad)
        colres_main[...] = jnp.dot(
            seg_ref[0], wct, preferred_element_type=jnp.float32
        ).astype(colres_main.dtype)                               # (C*Hs, Wt_pad)
        colres_aux[...] = jnp.dot(
            aux_ref[0], wct, preferred_element_type=jnp.float32
        ).astype(colres_aux.dtype)
        sum_main[...] = jnp.zeros_like(sum_main)
        sum_aux[...] = jnp.zeros_like(sum_aux)
        cnt[...] = jnp.zeros_like(cnt)

    wr = wr_ref[...]                  # (TI, Hs)  row-resize weights for this tile
    tgt = tgt_ref[0]                  # (TI, Wt_pad) int32 labels
    valid = (tgt != ignore_index).astype(jnp.float32)

    def head_loss_sum(colres_ref):
        # Online softmax over channels: only one (TI, Wt) channel slab plus the
        # three running slabs (m, s, picked) are live at any time.
        # Per-channel slices of the colres scratch are 8-aligned static ref
        # slices (Hs is expected to be a multiple of 8 for an aligned load).
        x0 = jnp.dot(wr, colres_ref[0:h_in, :],
                     preferred_element_type=jnp.float32)          # (TI, Wt_pad)
        m = x0
        s = jnp.ones_like(x0)                                     # exp(x0 - m) = 1
        picked = jnp.where(tgt == 0, x0, 0.0)
        for c in range(1, num_classes):
            xc = jnp.dot(wr, colres_ref[c * h_in:(c + 1) * h_in, :],
                         preferred_element_type=jnp.float32)
            m_new = jnp.maximum(m, xc)
            s = s * jnp.exp(m - m_new) + jnp.exp(xc - m_new)
            picked = picked + jnp.where(tgt == c, xc, 0.0)
            m = m_new
        lse = jnp.log(s) + m
        return jnp.sum((lse - picked) * valid, axis=(0, 1), keepdims=True)   # (1,1)

    sum_main[...] += head_loss_sum(colres_main)
    sum_aux[...] += head_loss_sum(colres_aux)
    cnt[...] += jnp.sum(valid, axis=(0, 1), keepdims=True)

    # --- per-image finalize: write a lane-dense (8,128) partial-sum block so the
    #     N grid axis can run megacore-parallel (no cross-image scratch carry).
    @pl.when(it == pl.num_programs(1) - 1)
    def _():
        row = jax.lax.broadcasted_iota(jnp.int32, (8, 128), 0)
        blk = jnp.where(row == 0, sum_main[...],
              jnp.where(row == 1, sum_aux[...],
              jnp.where(row == 2, cnt[...], 0.0)))
        out_ref[0] = blk


def fused_aux_ce_loss_pallas(seg, seg_aux, target, ignore_index, w_main, w_aux):
    """seg/seg_aux: (N, C, Hs, Ws); target: (N, Ht, Wt) int -> scalar weighted CE."""
    N, C, Hs, Ws = seg.shape
    _, Ht, Wt = target.shape

    # Keep the model dtype (e.g. bf16) end-to-end; MXU accumulates in f32 anyway.
    compute_dtype = seg.dtype

    TI = min(512, ((Ht + 7) // 8) * 8)            # output-row tile (multiple of 8)
    Ht_pad = ((Ht + TI - 1) // TI) * TI
    Wt_pad = ((Wt + 127) // 128) * 128            # lane-dense pixel slabs

    wr = _bilinear_matrix(Hs, Ht)                 # (Ht, Hs)
    wct = _bilinear_matrix(Ws, Wt).T              # (Ws, Wt)
    tgt = target.astype(jnp.int32)
    if Ht_pad > Ht:                               # padded rows contribute nothing
        wr = jnp.pad(wr, ((0, Ht_pad - Ht), (0, 0)))
    if Wt_pad > Wt:                               # padded lanes are ignore_index
        wct = jnp.pad(wct, ((0, 0), (0, Wt_pad - Wt)))
    tgt = jnp.pad(tgt, ((0, 0), (0, Ht_pad - Ht), (0, Wt_pad - Wt)),
                  constant_values=ignore_index)
    wr = wr.astype(compute_dtype)
    wct = wct.astype(compute_dtype)

    seg2 = seg.reshape(N, C * Hs, Ws)             # no dtype upcast
    aux2 = seg_aux.reshape(N, C * Hs, Ws)
    n_it = Ht_pad // TI

    partials = pl.pallas_call(
        functools.partial(_fused_upsample_ce_kernel, num_classes=C, h_in=Hs,
                          ignore_index=ignore_index),
        out_shape=jax.ShapeDtypeStruct((N, 8, 128), jnp.float32),
        grid=(N, n_it),
        in_specs=[pl.BlockSpec((1, C * Hs, Ws), lambda n, it: (n, 0, 0)),
                  pl.BlockSpec((1, C * Hs, Ws), lambda n, it: (n, 0, 0)),
                  pl.BlockSpec((TI, Hs), lambda n, it: (it, 0)),
                  pl.BlockSpec((Ws, Wt_pad), lambda n, it: (0, 0)),
                  pl.BlockSpec((1, TI, Wt_pad), lambda n, it: (n, it, 0))],
        out_specs=pl.BlockSpec((1, 8, 128), lambda n, it: (n, 0, 0)),
        scratch_shapes=[pltpu.VMEM((C * Hs, Wt_pad), compute_dtype),   # colres main
                        pltpu.VMEM((C * Hs, Wt_pad), compute_dtype),   # colres aux
                        pltpu.VMEM((1, 1), jnp.float32),
                        pltpu.VMEM((1, 1), jnp.float32),
                        pltpu.VMEM((1, 1), jnp.float32)],
        compiler_params=pltpu.CompilerParams(
            dimension_semantics=("parallel", "arbitrary"),
            vmem_limit_bytes=64 * 1024 * 1024),
    )(seg2, aux2, wr, wct, tgt)

    sum_main = jnp.sum(partials[:, 0, 0])
    sum_aux = jnp.sum(partials[:, 1, 0])
    cnt = jnp.sum(partials[:, 2, 0])
    # TODO(synk): PyTorch CE(mean) returns NaN when every pixel is ignored; the
    # denominator is clamped to 1 here instead.
    return (w_main * sum_main + w_aux * sum_aux) / jnp.maximum(cnt, 1.0)


# -----------------------------------------------------------------------------
# Kernel 2: supervised contrastive loss (_contrastive)
# -----------------------------------------------------------------------------
def _contrastive_kernel(feat_ref, labc_ref, labr_ref, out_ref, *,
                        temperature, base_temperature, num_valid):
    feat = feat_ref[...].astype(jnp.float32)            # (Mp, Dp), zero-padded
    labc = labc_ref[...]                                # (Mp, 1)  int32
    labr = labr_ref[...]                                # (1, Mp)  int32
    Mp = feat.shape[0]

    dots = jax.lax.dot_general(feat, feat, (((1,), (1,)), ((), ())),
                               preferred_element_type=jnp.float32) / temperature

    col_valid = (labr != _PAD_LABEL)                    # (1, Mp) bool
    row_valid = (labc != _PAD_LABEL).astype(jnp.float32)  # (Mp, 1)

    logits_max = jnp.max(jnp.where(col_valid, dots, -1e30), axis=1, keepdims=True)
    logits = dots - logits_max

    eq = (labc == labr)                                 # (Mp, Mp) bool
    ri = jax.lax.broadcasted_iota(jnp.int32, (Mp, Mp), 0)
    ci = jax.lax.broadcasted_iota(jnp.int32, (Mp, Mp), 1)
    cvf = col_valid.astype(jnp.float32)
    mask = jnp.where(eq & (ri != ci), 1.0, 0.0) * cvf   # positives, self excluded
    neg_mask = jnp.where(eq, 0.0, 1.0) * cvf            # negatives (padding out)

    exp_logits = jnp.exp(logits)
    neg_sum = jnp.sum(exp_logits * neg_mask, axis=1, keepdims=True)
    log_prob = logits - jnp.log(exp_logits + neg_sum)

    pos_cnt = jnp.sum(mask, axis=1, keepdims=True)
    # TODO(synk): torch reference divides by pos_cnt directly (NaN when an
    # anchor has zero positives); guarded here for numerical safety.
    mean_log_prob_pos = jnp.sum(mask * log_prob, axis=1, keepdims=True) / \
        jnp.maximum(pos_cnt, 1.0)
    loss_vec = -(temperature / base_temperature) * mean_log_prob_pos * row_valid
    out_ref[...] = jnp.sum(loss_vec, axis=(0, 1), keepdims=True) / float(num_valid)


def contrastive_pallas(feats_, labels_, temperature, base_temperature):
    """feats_: (A, n_view, D) float32, labels_: (A,) class ids -> scalar loss."""
    A, n_view, D = feats_.shape
    M = A * n_view
    Mp = max(128, ((M + 127) // 128) * 128)             # full-width vregs / MXU tiles
    Dp = ((D + 127) // 128) * 128

    # contrast_feature = cat(unbind(feats_, dim=1), dim=0)  -> view-major ordering
    anchor = jnp.transpose(feats_, (1, 0, 2)).reshape(M, D).astype(jnp.float32)
    anchor = jnp.pad(anchor, ((0, Mp - M), (0, Dp - D)))
    lab = jnp.tile(labels_.astype(jnp.int32), n_view)
    lab = jnp.pad(lab, (0, Mp - M), constant_values=_PAD_LABEL)

    out = pl.pallas_call(
        functools.partial(_contrastive_kernel,
                          temperature=temperature,
                          base_temperature=base_temperature,
                          num_valid=M),
        out_shape=jax.ShapeDtypeStruct((1, 1), jnp.float32),
        grid=(1,),
        in_specs=[pl.BlockSpec((Mp, Dp), lambda i: (0, 0)),
                  pl.BlockSpec((Mp, 1), lambda i: (0, 0)),
                  pl.BlockSpec((1, Mp), lambda i: (0, 0))],
        out_specs=pl.BlockSpec((1, 1), lambda i: (0, 0)),
    )(anchor, lab.reshape(Mp, 1), lab.reshape(1, Mp))
    return out[0, 0]


# -----------------------------------------------------------------------------
# Glue: nearest resize for labels, hard-anchor sampling (host side)
# -----------------------------------------------------------------------------
def nearest_resize_labels(labels, out_h, out_w):
    """labels: (N, H, W) -> (N, out_h, out_w), PyTorch 'nearest' semantics."""
    N, H, W = labels.shape
    rows = jnp.floor(jnp.arange(out_h) * (H / out_h)).astype(jnp.int32)
    cols = jnp.floor(jnp.arange(out_w) * (W / out_w)).astype(jnp.int32)
    return labels[:, rows][:, :, cols]


def hard_anchor_sampling_np(X, y_hat, y, ignore_label, max_samples, max_views):
    """numpy re-implementation of PixelContrastLoss._hard_anchor_sampling."""
    batch_size, _, feat_dim = X.shape
    classes, total_classes = [], 0
    for ii in range(batch_size):
        this_y = y_hat[ii]
        this_classes = [c for c in np.unique(this_y) if c != ignore_label]
        this_classes = [c for c in this_classes if (this_y == c).sum() > max_views]
        classes.append(this_classes)
        total_classes += len(this_classes)
    if total_classes == 0:
        return None, None

    n_view = min(max_samples // total_classes, max_views)
    if n_view <= 0:
        return None, None
    X_ = np.zeros((total_classes, n_view, feat_dim), dtype=np.float32)
    y_ = np.zeros((total_classes,), dtype=np.float32)
    ptr = 0
    for ii in range(batch_size):
        this_y_hat, this_y = y_hat[ii], y[ii]
        for cls_id in classes[ii]:
            hard = np.nonzero((this_y_hat == cls_id) & (this_y != cls_id))[0]
            easy = np.nonzero((this_y_hat == cls_id) & (this_y == cls_id))[0]
            num_hard, num_easy = len(hard), len(easy)
            if num_hard >= n_view / 2 and num_easy >= n_view / 2:
                num_hard_keep = n_view // 2
                num_easy_keep = n_view - num_hard_keep
            elif num_hard >= n_view / 2:
                num_easy_keep = num_easy
                num_hard_keep = n_view - num_easy_keep
            else:
                num_hard_keep = num_hard
                num_easy_keep = n_view - num_hard_keep
            # TODO(synk): torch.randperm replaced by deterministic take-first order
            idx = np.concatenate([hard[:num_hard_keep], easy[:num_easy_keep]])
            X_[ptr] = X[ii, idx]
            y_[ptr] = cls_id
            ptr += 1
    return X_, y_


# -----------------------------------------------------------------------------
# ContrastAuxCELoss forward
# -----------------------------------------------------------------------------
def contrast_aux_ce_loss(preds, target, with_embed=False):
    seg = preds['seg']            # (N, C, Hs, Ws)
    seg_aux = preds['seg_aux']    # (N, C, Hs, Ws)
    embedding = preds['embed']    # (N, D, He, We)
    ignore = CONFIG['ignore_index']

    # --- segmentation CE (FSAuxCELoss): fused upsample + dual-head CE kernel ---
    loss = fused_aux_ce_loss_pallas(
        seg, seg_aux, target, ignore,
        CONFIG['seg_loss_weight'], CONFIG['aux_loss_weight'])

    if not with_embed:
        # Forward value of `loss + 0 * loss_contrast`; skip the contrast branch
        # (and its host-side numpy sampling sync) entirely.
        return loss

    # --- pixel contrastive loss ---
    N, C, Hs, Ws = seg.shape
    _, D, He, We = embedding.shape
    predict = jnp.argmax(seg, axis=1).reshape(N, -1)                       # (N, Hs*Ws)
    labels_ds = nearest_resize_labels(target, He, We).astype(jnp.int32)
    labels_ds = labels_ds.reshape(N, -1)                                   # (N, He*We)
    feats = jnp.transpose(embedding, (0, 2, 3, 1)).reshape(N, -1, D)       # (N, He*We, D)

    X_, y_ = hard_anchor_sampling_np(
        np.asarray(feats), np.asarray(labels_ds), np.asarray(predict),
        ignore, CONFIG['max_samples'], CONFIG['max_views'])

    if X_ is None:
        loss_contrast = jnp.float32(0.0)
    else:
        loss_contrast = contrastive_pallas(
            jnp.asarray(X_), jnp.asarray(y_),
            CONFIG['temperature'], CONFIG['base_temperature'])

    return loss + CONFIG['loss_weight'] * loss_contrast


# -----------------------------------------------------------------------------
# Main
# -----------------------------------------------------------------------------
if __name__ == "__main__":
    key = jax.random.PRNGKey(0)
    N, C, D = 2, 4, 32
    Hs, Ws = 8, 8       # seg / embedding spatial size
    Ht, Wt = 16, 16     # target spatial size
    k1, k2, k3, k4 = jax.random.split(key, 4)

    seg = jax.random.normal(k1, (N, C, Hs, Ws), jnp.float32)
    seg_aux = jax.random.normal(k2, (N, C, Hs, Ws), jnp.float32)
    embed = jax.random.normal(k3, (N, D, Hs, Ws), jnp.float32)
    # The reference pipeline feeds L2-normalized projection embeddings; keep the
    # synthetic inputs in the same regime so exp()/log() stay in float32 range.
    embed = embed / jnp.linalg.norm(embed, axis=1, keepdims=True)
    target = jax.random.randint(k4, (N, Ht, Wt), 0, C).astype(jnp.int32)
    target = target.at[:, :2, :2].set(-1)   # some ignore pixels

    preds = {'seg': seg, 'seg_aux': seg_aux, 'embed': embed}

    loss_no_embed = contrast_aux_ce_loss(preds, target, with_embed=False)
    loss_with_embed = contrast_aux_ce_loss(preds, target, with_embed=True)
    jax.block_until_ready((loss_no_embed, loss_with_embed))
    assert jnp.isfinite(loss_no_embed) and jnp.isfinite(loss_with_embed)
    print("KERNEL_OK")
</pallas_src>

<mosaic_0001>
module attributes {stable_mosaic.version = 11 : i64} {
  func.func @_fused_upsample_ce_kernel(%arg0: i32, %arg1: i32, %arg2: memref<1x32x8xf32, #tpu.memory_space<vmem>>, %arg3: memref<1x32x8xf32, #tpu.memory_space<vmem>>, %arg4: memref<16x8xf32, #tpu.memory_space<vmem>>, %arg5: memref<8x128xf32, #tpu.memory_space<vmem>>, %arg6: memref<1x16x128xi32, #tpu.memory_space<vmem>>, %arg7: memref<1x8x128xf32, #tpu.memory_space<vmem>>, %arg8: memref<32x128xf32, #tpu.memory_space<vmem>>, %arg9: memref<32x128xf32, #tpu.memory_space<vmem>>, %arg10: memref<1x1xf32, #tpu.memory_space<vmem>>, %arg11: memref<1x1xf32, #tpu.memory_space<vmem>>, %arg12: memref<1x1xf32, #tpu.memory_space<vmem>>) attributes {dimension_semantics = [#tpu.dimension_semantics<parallel>, #tpu.dimension_semantics<arbitrary>], iteration_bounds = array<i64: 2, 1>, scalar_prefetch = 0 : i64, scratch_operands = 5 : i64, tpu.core_type = #tpu.core_type<tc>, window_params = [{transform_indices = @transform_0, window_bounds = array<i64: 1, 32, 8>}, {transform_indices = @transform_1, window_bounds = array<i64: 1, 32, 8>}, {transform_indices = @transform_2, window_bounds = array<i64: 16, 8>}, {pipeline_mode = #tpu.pipeline_mode<synchronous>, transform_indices = @transform_3, window_bounds = array<i64: 8, 128>}, {transform_indices = @transform_4, window_bounds = array<i64: 1, 16, 128>}, {transform_indices = @transform_5, window_bounds = array<i64: 1, 8, 128>}]} {
    %c0_i32 = arith.constant 0 : i32
    %0 = arith.cmpi eq, %arg1, %c0_i32 : i32
    %1 = arith.extui %0 : i1 to i32
    %c0_i32_0 = arith.constant 0 : i32
    %2 = arith.cmpi ne, %1, %c0_i32_0 : i32
    scf.if %2 {
      %c0_57 = arith.constant 0 : index
      %c0_58 = arith.constant 0 : index
      %143 = vector.load %arg5[%c0_57, %c0_58] : memref<8x128xf32, #tpu.memory_space<vmem>>, vector<8x128xf32>
      %c0_59 = arith.constant 0 : index
      %c0_60 = arith.constant 0 : index
      %c0_61 = arith.constant 0 : index
      %144 = vector.load %arg2[%c0_59, %c0_60, %c0_61] : memref<1x32x8xf32, #tpu.memory_space<vmem>>, vector<1x32x8xf32>
      %145 = vector.shape_cast %144 : vector<1x32x8xf32> to vector<32x8xf32>
      %cst_62 = arith.constant dense<0.000000e+00> : vector<32x128xf32>
      %146 = tpu.matmul %145, %143, %cst_62 {dimension_numbers = #tpu.dot_dimension_numbers<[1], [0], [0], [1], [0, 0, 1, 1], [], []>} : vector<32x8xf32>, vector<8x128xf32>, vector<32x128xf32> -> vector<32x128xf32>
      %c0_63 = arith.constant 0 : index
      %c0_64 = arith.constant 0 : index
      %147 = vector.load %arg8[%c0_63, %c0_64] : memref<32x128xf32, #tpu.memory_space<vmem>>, vector<32x128xf32>
      tpu.vector_store %arg8[%c0_63, %c0_64], %146 {strides = array<i32>} : memref<32x128xf32, #tpu.memory_space<vmem>>, vector<32x128xf32>,
      %c0_65 = arith.constant 0 : index
      %c0_66 = arith.constant 0 : index
      %c0_67 = arith.constant 0 : index
      %148 = vector.load %arg3[%c0_65, %c0_66, %c0_67] : memref<1x32x8xf32, #tpu.memory_space<vmem>>, vector<1x32x8xf32>
      %149 = vector.shape_cast %148 : vector<1x32x8xf32> to vector<32x8xf32>
      %cst_68 = arith.constant dense<0.000000e+00> : vector<32x128xf32>
      %150 = tpu.matmul %149, %143, %cst_68 {dimension_numbers = #tpu.dot_dimension_numbers<[1], [0], [0], [1], [0, 0, 1, 1], [], []>} : vector<32x8xf32>, vector<8x128xf32>, vector<32x128xf32> -> vector<32x128xf32>
      %c0_69 = arith.constant 0 : index
      %c0_70 = arith.constant 0 : index
      %151 = vector.load %arg9[%c0_69, %c0_70] : memref<32x128xf32, #tpu.memory_space<vmem>>, vector<32x128xf32>
      tpu.vector_store %arg9[%c0_69, %c0_70], %150 {strides = array<i32>} : memref<32x128xf32, #tpu.memory_space<vmem>>, vector<32x128xf32>,
      %cst_71 = arith.constant 0.000000e+00 : f32
      %152 = vector.broadcast %cst_71 : f32 to vector<1x1xf32>
      %c0_72 = arith.constant 0 : index
      %c0_73 = arith.constant 0 : index
      %153 = vector.load %arg10[%c0_72, %c0_73] : memref<1x1xf32, #tpu.memory_space<vmem>>, vector<1x1xf32>
      tpu.vector_store %arg10[%c0_72, %c0_73], %152 {strides = array<i32>} : memref<1x1xf32, #tpu.memory_space<vmem>>, vector<1x1xf32>,
      %cst_74 = arith.constant 0.000000e+00 : f32
      %154 = vector.broadcast %cst_74 : f32 to vector<1x1xf32>
      %c0_75 = arith.constant 0 : index
      %c0_76 = arith.constant 0 : index
      %155 = vector.load %arg11[%c0_75, %c0_76] : memref<1x1xf32, #tpu.memory_space<vmem>>, vector<1x1xf32>
      tpu.vector_store %arg11[%c0_75, %c0_76], %154 {strides = array<i32>} : memref<1x1xf32, #tpu.memory_space<vmem>>, vector<1x1xf32>,
      %cst_77 = arith.constant 0.000000e+00 : f32
      %156 = vector.broadcast %cst_77 : f32 to vector<1x1xf32>
      %c0_78 = arith.constant 0 : index
      %c0_79 = arith.constant 0 : index
      %157 = vector.load %arg12[%c0_78, %c0_79] : memref<1x1xf32, #tpu.memory_space<vmem>>, vector<1x1xf32>
      tpu.vector_store %arg12[%c0_78, %c0_79], %156 {strides = array<i32>} : memref<1x1xf32, #tpu.memory_space<vmem>>, vector<1x1xf32>,
    } else {
    }
    %c0 = arith.constant 0 : index
    %c0_1 = arith.constant 0 : index
    %3 = vector.load %arg4[%c0, %c0_1] : memref<16x8xf32, #tpu.memory_space<vmem>>, vector<16x8xf32>
    %c0_2 = arith.constant 0 : index
    %c0_3 = arith.constant 0 : index
    %c0_4 = arith.constant 0 : index
    %4 = vector.load %arg6[%c0_2, %c0_3, %c0_4] : memref<1x16x128xi32, #tpu.memory_space<vmem>>, vector<1x16x128xi32>
    %5 = vector.shape_cast %4 : vector<1x16x128xi32> to vector<16x128xi32>
    %c-1_i32 = arith.constant -1 : i32
    %6 = vector.broadcast %c-1_i32 : i32 to vector<16x128xi32>
    %7 = arith.cmpi ne, %5, %6 : vector<16x128xi32>
    %8 = arith.extui %7 : vector<16x128xi1> to vector<16x128xi32>
    %9 = arith.sitofp %8 : vector<16x128xi32> to vector<16x128xf32>
    %c0_5 = arith.constant 0 : index
    %c0_6 = arith.constant 0 : index
    %10 = vector.load %arg10[%c0_5, %c0_6] : memref<1x1xf32, #tpu.memory_space<vmem>>, vector<1x1xf32>
    %c0_7 = arith.constant 0 : index
    %c0_8 = arith.constant 0 : index
    %11 = vector.load %arg8[%c0_7, %c0_8] : memref<32x128xf32, #tpu.memory_space<vmem>>, vector<8x128xf32>
    %cst = arith.constant dense<0.000000e+00> : vector<16x128xf32>
    %12 = tpu.matmul %3, %11, %cst {dimension_numbers = #tpu.dot_dimension_numbers<[1], [0], [0], [1], [0, 0, 1, 1], [], []>} : vector<16x8xf32>, vector<8x128xf32>, vector<16x128xf32> -> vector<16x128xf32>
    %cst_9 = arith.constant 1.000000e+00 : f32
    %13 = vector.broadcast %cst_9 : f32 to vector<16x128xf32>
    %c0_i32_10 = arith.constant 0 : i32
    %14 = vector.broadcast %c0_i32_10 : i32 to vector<16x128xi32>
    %15 = arith.cmpi eq, %5, %14 : vector<16x128xi32>
    %cst_11 = arith.constant 0.000000e+00 : f32
    %16 = vector.broadcast %cst_11 : f32 to vector<16x128xf32>
    %17 = arith.select %15, %12, %16 : vector<16x128xi1>, vector<16x128xf32>
    %c8 = arith.constant 8 : index
    %c0_12 = arith.constant 0 : index
    %18 = vector.load %arg8[%c8, %c0_12] : memref<32x128xf32, #tpu.memory_space<vmem>>, vector<8x128xf32>
    %cst_13 = arith.constant dense<0.000000e+00> : vector<16x128xf32>
    %19 = tpu.matmul %3, %18, %cst_13 {dimension_numbers = #tpu.dot_dimension_numbers<[1], [0], [0], [1], [0, 0, 1, 1], [], []>} : vector<16x8xf32>, vector<8x128xf32>, vector<16x128xf32> -> vector<16x128xf32>
    %20 = arith.maximumf %12, %19 : vector<16x128xf32>
    %21 = arith.subf %12, %20 : vector<16x128xf32>
    %22 = math.exp %21 : vector<16x128xf32>
    %23 = arith.mulf %13, %22 : vector<16x128xf32>
    %24 = arith.subf %19, %20 : vector<16x128xf32>
    %25 = math.exp %24 : vector<16x128xf32>
    %26 = arith.addf %23, %25 : vector<16x128xf32>
    %c1_i32 = arith.constant 1 : i32
    %27 = vector.broadcast %c1_i32 : i32 to vector<16x128xi32>
    %28 = arith.cmpi eq, %5, %27 : vector<16x128xi32>
    %cst_14 = arith.constant 0.000000e+00 : f32
    %29 = vector.broadcast %cst_14 : f32 to vector<16x128xf32>
    %30 = arith.select %28, %19, %29 : vector<16x128xi1>, vector<16x128xf32>
    %31 = arith.addf %17, %30 : vector<16x128xf32>
    %c16 = arith.constant 16 : index
    %c0_15 = arith.constant 0 : index
    %32 = vector.load %arg8[%c16, %c0_15] : memref<32x128xf32, #tpu.memory_space<vmem>>, vector<8x128xf32>
    %cst_16 = arith.constant dense<0.000000e+00> : vector<16x128xf32>
    %33 = tpu.matmul %3, %32, %cst_16 {dimension_numbers = #tpu.dot_dimension_numbers<[1], [0], [0], [1], [0, 0, 1, 1], [], []>} : vector<16x8xf32>, vector<8x128xf32>, vector<16x128xf32> -> vector<16x128xf32>
    %34 = arith.maximumf %20, %33 : vector<16x128xf32>
    %35 = arith.subf %20, %34 : vector<16x128xf32>
    %36 = math.exp %35 : vector<16x128xf32>
    %37 = arith.mulf %26, %36 : vector<16x128xf32>
    %38 = arith.subf %33, %34 : vector<16x128xf32>
    %39 = math.exp %38 : vector<16x128xf32>
    %40 = arith.addf %37, %39 : vector<16x128xf32>
    %c2_i32 = arith.constant 2 : i32
    %41 = vector.broadcast %c2_i32 : i32 to vector<16x128xi32>
    %42 = arith.cmpi eq, %5, %41 : vector<16x128xi32>
    %cst_17 = arith.constant 0.000000e+00 : f32
    %43 = vector.broadcast %cst_17 : f32 to vector<16x128xf32>
    %44 = arith.select %42, %33, %43 : vector<16x128xi1>, vector<16x128xf32>
    %45 = arith.addf %31, %44 : vector<16x128xf32>
    %c24 = arith.constant 24 : index
    %c0_18 = arith.constant 0 : index
    %46 = vector.load %arg8[%c24, %c0_18] : memref<32x128xf32, #tpu.memory_space<vmem>>, vector<8x128xf32>
    %cst_19 = arith.constant dense<0.000000e+00> : vector<16x128xf32>
    %47 = tpu.matmul %3, %46, %cst_19 {dimension_numbers = #tpu.dot_dimension_numbers<[1], [0], [0], [1], [0, 0, 1, 1], [], []>} : vector<16x8xf32>, vector<8x128xf32>, vector<16x128xf32> -> vector<16x128xf32>
    %48 = arith.maximumf %34, %47 : vector<16x128xf32>
    %49 = arith.subf %34, %48 : vector<16x128xf32>
    %50 = math.exp %49 : vector<16x128xf32>
    %51 = arith.mulf %40, %50 : vector<16x128xf32>
    %52 = arith.subf %47, %48 : vector<16x128xf32>
    %53 = math.exp %52 : vector<16x128xf32>
    %54 = arith.addf %51, %53 : vector<16x128xf32>
    %c3_i32 = arith.constant 3 : i32
    %55 = vector.broadcast %c3_i32 : i32 to vector<16x128xi32>
    %56 = arith.cmpi eq, %5, %55 : vector<16x128xi32>
    %cst_20 = arith.constant 0.000000e+00 : f32
    %57 = vector.broadcast %cst_20 : f32 to vector<16x128xf32>
    %58 = arith.select %56, %47, %57 : vector<16x128xi1>, vector<16x128xf32>
    %59 = arith.addf %45, %58 : vector<16x128xf32>
    %60 = math.log %54 : vector<16x128xf32>
    %61 = arith.addf %60, %48 : vector<16x128xf32>
    %62 = arith.subf %61, %59 : vector<16x128xf32>
    %63 = arith.mulf %62, %9 : vector<16x128xf32>
    %64 = vector.shape_cast %63 : vector<16x128xf32> to vector<1x16x128xf32>
    %cst_21 = arith.constant dense<0.000000e+00> : vector<1xf32>
    %65 = vector.multi_reduction <add>, %64, %cst_21 [1, 2] : vector<1x16x128xf32> to vector<1xf32>
    %66 = vector.shape_cast %65 : vector<1xf32> to vector<1x1x1xf32>
    %67 = vector.extract %66[0, 0, 0] : f32 from vector<1x1x1xf32>
    %68 = vector.broadcast %67 : f32 to vector<1x1xf32>
    %69 = arith.addf %10, %68 : vector<1x1xf32>
    %c0_22 = arith.constant 0 : index
    %c0_23 = arith.constant 0 : index
    %70 = vector.load %arg10[%c0_22, %c0_23] : memref<1x1xf32, #tpu.memory_space<vmem>>, vector<1x1xf32>
    tpu.vector_store %arg10[%c0_22, %c0_23], %69 {strides = array<i32>} : memref<1x1xf32, #tpu.memory_space<vmem>>, vector<1x1xf32>,
    %c0_24 = arith.constant 0 : index
    %c0_25 = arith.constant 0 : index
    %71 = vector.load %arg11[%c0_24, %c0_25] : memref<1x1xf32, #tpu.memory_space<vmem>>, vector<1x1xf32>
    %c0_26 = arith.constant 0 : index
    %c0_27 = arith.constant 0 : index
    %72 = vector.load %arg9[%c0_26, %c0_27] : memref<32x128xf32, #tpu.memory_space<vmem>>, vector<8x128xf32>
    %cst_28 = arith.constant dense<0.000000e+00> : vector<16x128xf32>
    %73 = tpu.matmul %3, %72, %cst_28 {dimension_numbers = #tpu.dot_dimension_numbers<[1], [0], [0], [1], [0, 0, 1, 1], [], []>} : vector<16x8xf32>, vector<8x128xf32>, vector<16x128xf32> -> vector<16x128xf32>
    %cst_29 = arith.constant 1.000000e+00 : f32
    %74 = vector.broadcast %cst_29 : f32 to vector<16x128xf32>
    %c0_i32_30 = arith.constant 0 : i32
    %75 = vector.broadcast %c0_i32_30 : i32 to vector<16x128xi32>
    %76 = arith.cmpi eq, %5, %75 : vector<16x128xi32>
    %cst_31 = arith.constant 0.000000e+00 : f32
    %77 = vector.broadcast %cst_31 : f32 to vector<16x128xf32>
    %78 = arith.select %76, %73, %77 : vector<16x128xi1>, vector<16x128xf32>
    %c8_32 = arith.constant 8 : index
    %c0_33 = arith.constant 0 : index
    %79 = vector.load %arg9[%c8_32, %c0_33] : memref<32x128xf32, #tpu.memory_space<vmem>>, vector<8x128xf32>
    %cst_34 = arith.constant dense<0.000000e+00> : vector<16x128xf32>
    %80 = tpu.matmul %3, %79, %cst_34 {dimension_numbers = #tpu.dot_dimension_numbers<[1], [0], [0], [1], [0, 0, 1, 1], [], []>} : vector<16x8xf32>, vector<8x128xf32>, vector<16x128xf32> -> vector<16x128xf32>
    %81 = arith.maximumf %73, %80 : vector<16x128xf32>
    %82 = arith.subf %73, %81 : vector<16x128xf32>
    %83 = math.exp %82 : vector<16x128xf32>
    %84 = arith.mulf %74, %83 : vector<16x128xf32>
    %85 = arith.subf %80, %81 : vector<16x128xf32>
    %86 = math.exp %85 : vector<16x128xf32>
    %87 = arith.addf %84, %86 : vector<16x128xf32>
    %c1_i32_35 = arith.constant 1 : i32
    %88 = vector.broadcast %c1_i32_35 : i32 to vector<16x128xi32>
    %89 = arith.cmpi eq, %5, %88 : vector<16x128xi32>
    %cst_36 = arith.constant 0.000000e+00 : f32
    %90 = vector.broadcast %cst_36 : f32 to vector<16x128xf32>
    %91 = arith.select %89, %80, %90 : vector<16x128xi1>, vector<16x128xf32>
    %92 = arith.addf %78, %91 : vector<16x128xf32>
    %c16_37 = arith.constant 16 : index
    %c0_38 = arith.constant 0 : index
    %93 = vector.load %arg9[%c16_37, %c0_38] : memref<32x128xf32, #tpu.memory_space<vmem>>, vector<8x128xf32>
    %cst_39 = arith.constant dense<0.000000e+00> : vector<16x128xf32>
    %94 = tpu.matmul %3, %93, %cst_39 {dimension_numbers = #tpu.dot_dimension_numbers<[1], [0], [0], [1], [0, 0, 1, 1], [], []>} : vector<16x8xf32>, vector<8x128xf32>, vector<16x128xf32> -> vector<16x128xf32>
    %95 = arith.maximumf %81, %94 : vector<16x128xf32>
    %96 = arith.subf %81, %95 : vector<16x128xf32>
    %97 = math.exp %96 : vector<16x128xf32>
    %98 = arith.mulf %87, %97 : vector<16x128xf32>
    %99 = arith.subf %94, %95 : vector<16x128xf32>
    %100 = math.exp %99 : vector<16x128xf32>
    %101 = arith.addf %98, %100 : vector<16x128xf32>
    %c2_i32_40 = arith.constant 2 : i32
    %102 = vector.broadcast %c2_i32_40 : i32 to vector<16x128xi32>
    %103 = arith.cmpi eq, %5, %102 : vector<16x128xi32>
    %cst_41 = arith.constant 0.000000e+00 : f32
    %104 = vector.broadcast %cst_41 : f32 to vector<16x128xf32>
    %105 = arith.select %103, %94, %104 : vector<16x128xi1>, vector<16x128xf32>
    %106 = arith.addf %92, %105 : vector<16x128xf32>
    %c24_42 = arith.constant 24 : index
    %c0_43 = arith.constant 0 : index
    %107 = vector.load %arg9[%c24_42, %c0_43] : memref<32x128xf32, #tpu.memory_space<vmem>>, vector<8x128xf32>
    %cst_44 = arith.constant dense<0.000000e+00> : vector<16x128xf32>
    %108 = tpu.matmul %3, %107, %cst_44 {dimension_numbers = #tpu.dot_dimension_numbers<[1], [0], [0], [1], [0, 0, 1, 1], [], []>} : vector<16x8xf32>, vector<8x128xf32>, vector<16x128xf32> -> vector<16x128xf32>
    %109 = arith.maximumf %95, %108 : vector<16x128xf32>
    %110 = arith.subf %95, %109 : vector<16x128xf32>
    %111 = math.exp %110 : vector<16x128xf32>
    %112 = arith.mulf %101, %111 : vector<16x128xf32>
    %113 = arith.subf %108, %109 : vector<16x128xf32>
    %114 = math.exp %113 : vector<16x128xf32>
    %115 = arith.addf %112, %114 : vector<16x128xf32>
    %c3_i32_45 = arith.constant 3 : i32
    %116 = vector.broadcast %c3_i32_45 : i32 to vector<16x128xi32>
    %117 = arith.cmpi eq, %5, %116 : vector<16x128xi32>
    %cst_46 = arith.constant 0.000000e+00 : f32
    %118 = vector.broadcast %cst_46 : f32 to vector<16x128xf32>
    %119 = arith.select %117, %108, %118 : vector<16x128xi1>, vector<16x128xf32>
    %120 = arith.addf %106, %119 : vector<16x128xf32>
    %121 = math.log %115 : vector<16x128xf32>
    %122 = arith.addf %121, %109 : vector<16x128xf32>
    %123 = arith.subf %122, %120 : vector<16x128xf32>
    %124 = arith.mulf %123, %9 : vector<16x128xf32>
    %125 = vector.shape_cast %124 : vector<16x128xf32> to vector<1x16x128xf32>
    %cst_47 = arith.constant dense<0.000000e+00> : vector<1xf32>
    %126 = vector.multi_reduction <add>, %125, %cst_47 [1, 2] : vector<1x16x128xf32> to vector<1xf32>
    %127 = vector.shape_cast %126 : vector<1xf32> to vector<1x1x1xf32>
    %128 = vector.extract %127[0, 0, 0] : f32 from vector<1x1x1xf32>
    %129 = vector.broadcast %128 : f32 to vector<1x1xf32>
    %130 = arith.addf %71, %129 : vector<1x1xf32>
    %c0_48 = arith.constant 0 : index
    %c0_49 = arith.constant 0 : index
    %131 = vector.load %arg11[%c0_48, %c0_49] : memref<1x1xf32, #tpu.memory_space<vmem>>, vector<1x1xf32>
    tpu.vector_store %arg11[%c0_48, %c0_49], %130 {strides = array<i32>} : memref<1x1xf32, #tpu.memory_space<vmem>>, vector<1x1xf32>,
    %c0_50 = arith.constant 0 : index
    %c0_51 = arith.constant 0 : index
    %132 = vector.load %arg12[%c0_50, %c0_51] : memref<1x1xf32, #tpu.memory_space<vmem>>, vector<1x1xf32>
    %133 = vector.shape_cast %9 : vector<16x128xf32> to vector<1x16x128xf32>
    %cst_52 = arith.constant dense<0.000000e+00> : vector<1xf32>
    %134 = vector.multi_reduction <add>, %133, %cst_52 [1, 2] : vector<1x16x128xf32> to vector<1xf32>
    %135 = vector.shape_cast %134 : vector<1xf32> to vector<1x1x1xf32>
    %136 = vector.extract %135[0, 0, 0] : f32 from vector<1x1x1xf32>
    %137 = vector.broadcast %136 : f32 to vector<1x1xf32>
    %138 = arith.addf %132, %137 : vector<1x1xf32>
    %c0_53 = arith.constant 0 : index
    %c0_54 = arith.constant 0 : index
    %139 = vector.load %arg12[%c0_53, %c0_54] : memref<1x1xf32, #tpu.memory_space<vmem>>, vector<1x1xf32>
    tpu.vector_store %arg12[%c0_53, %c0_54], %138 {strides = array<i32>} : memref<1x1xf32, #tpu.memory_space<vmem>>, vector<1x1xf32>,
    %c0_i32_55 = arith.constant 0 : i32
    %140 = arith.cmpi eq, %arg1, %c0_i32_55 : i32
    %141 = arith.extui %140 : i1 to i32
    %c0_i32_56 = arith.constant 0 : i32
    %142 = arith.cmpi ne, %141, %c0_i32_56 : i32
    scf.if %142 {
      %143 = tpu.iota {dimensions = array<i32: 0>} : vector<8x128xi32>
      %c0_i32_57 = arith.constant 0 : i32
      %144 = vector.broadcast %c0_i32_57 : i32 to vector<8x128xi32>
      %145 = arith.cmpi eq, %143, %144 : vector<8x128xi32>
      %c0_58 = arith.constant 0 : index
      %c0_59 = arith.constant 0 : index
      %146 = vector.load %arg10[%c0_58, %c0_59] : memref<1x1xf32, #tpu.memory_space<vmem>>, vector<1x1xf32>
      %c1_i32_60 = arith.constant 1 : i32
      %147 = vector.broadcast %c1_i32_60 : i32 to vector<8x128xi32>
      %148 = arith.cmpi eq, %143, %147 : vector<8x128xi32>
      %c0_61 = arith.constant 0 : index
      %c0_62 = arith.constant 0 : index
      %149 = vector.load %arg11[%c0_61, %c0_62] : memref<1x1xf32, #tpu.memory_space<vmem>>, vector<1x1xf32>
      %c2_i32_63 = arith.constant 2 : i32
      %150 = vector.broadcast %c2_i32_63 : i32 to vector<8x128xi32>
      %151 = arith.cmpi eq, %143, %150 : vector<8x128xi32>
      %c0_64 = arith.constant 0 : index
      %c0_65 = arith.constant 0 : index
      %152 = vector.load %arg12[%c0_64, %c0_65] : memref<1x1xf32, #tpu.memory_space<vmem>>, vector<1x1xf32>
      %cst_66 = arith.constant 0.000000e+00 : f32
      %153 = vector.shape_cast %152 : vector<1x1xf32> to vector<1x1xf32>
      %154 = vector.broadcast %153 : vector<1x1xf32> to vector<8x128xf32>
      %155 = vector.broadcast %cst_66 : f32 to vector<8x128xf32>
      %156 = arith.select %151, %154, %155 : vector<8x128xi1>, vector<8x128xf32>
      %157 = vector.shape_cast %149 : vector<1x1xf32> to vector<1x1xf32>
      %158 = vector.broadcast %157 : vector<1x1xf32> to vector<8x128xf32>
      %159 = arith.select %148, %158, %156 : vector<8x128xi1>, vector<8x128xf32>
      %160 = vector.shape_cast %146 : vector<1x1xf32> to vector<1x1xf32>
      %161 = vector.broadcast %160 : vector<1x1xf32> to vector<8x128xf32>
      %162 = arith.select %145, %161, %159 : vector<8x128xi1>, vector<8x128xf32>
      %c0_67 = arith.constant 0 : index
      %c0_68 = arith.constant 0 : index
      %c0_69 = arith.constant 0 : index
      %163 = vector.load %arg7[%c0_67, %c0_68, %c0_69] : memref<1x8x128xf32, #tpu.memory_space<vmem>>, vector<1x8x128xf32>
      %164 = vector.shape_cast %163 : vector<1x8x128xf32> to vector<8x128xf32>
      %165 = vector.shape_cast %162 : vector<8x128xf32> to vector<1x8x128xf32>
      tpu.vector_store %arg7[%c0_67, %c0_68, %c0_69], %165 {strides = array<i32>} : memref<1x8x128xf32, #tpu.memory_space<vmem>>, vector<1x8x128xf32>,
    } else {
    }
    return
  }
  func.func @transform_0(%arg0: i32, %arg1: i32) -> (i32, i32, i32) {
    %c0_i32 = arith.constant 0 : i32
    %c0_i32_0 = arith.constant 0 : i32
    %c0_i32_1 = arith.constant 0 : i32
    return %arg0, %c0_i32, %c0_i32_0 : i32, i32, i32
  }
  func.func @transform_1(%arg0: i32, %arg1: i32) -> (i32, i32, i32) {
    %c0_i32 = arith.constant 0 : i32
    %c0_i32_0 = arith.constant 0 : i32
    %c0_i32_1 = arith.constant 0 : i32
    return %arg0, %c0_i32, %c0_i32_0 : i32, i32, i32
  }
  func.func @transform_2(%arg0: i32, %arg1: i32) -> (i32, i32) {
    %c0_i32 = arith.constant 0 : i32
    %c0_i32_0 = arith.constant 0 : i32
    return %arg1, %c0_i32 : i32, i32
  }
  func.func @transform_3(%arg0: i32, %arg1: i32) -> (i32, i32) {
    %c0_i32 = arith.constant 0 : i32
    %c0_i32_0 = arith.constant 0 : i32
    %c0_i32_1 = arith.constant 0 : i32
    return %c0_i32, %c0_i32_0 : i32, i32
  }
  func.func @transform_4(%arg0: i32, %arg1: i32) -> (i32, i32, i32) {
    %c0_i32 = arith.constant 0 : i32
    %c0_i32_0 = arith.constant 0 : i32
    return %arg0, %arg1, %c0_i32 : i32, i32, i32
  }
  func.func @transform_5(%arg0: i32, %arg1: i32) -> (i32, i32, i32) {
    %c0_i32 = arith.constant 0 : i32
    %c0_i32_0 = arith.constant 0 : i32
    %c0_i32_1 = arith.constant 0 : i32
    return %arg0, %c0_i32, %c0_i32_0 : i32, i32, i32
  }
}

</mosaic_0001>

<llo_original>
// kernel: tpu_custom_call.1
$region0: #{tpu_custom_call.1}
  #allocation0 [shape = 'u32[]', space=smem, size = 0x4, offset = 0x4, fixed_abs, tag = 'smem constant byte address 0x4 - core index']
  #allocation1 [shape = 'u32[144,128]{1,0:T(1,128)}', space=vmem, size = 0x12000, scoped, tag = 'internal scratch']
  #allocation2 [shape = 'f32[32,128]{1,0:T(8,128)}', space=vmem, size = 0x4000, scoped, tag = 'scratch operand']
  #allocation3 [shape = 'f32[32,128]{1,0:T(8,128)}', space=vmem, size = 0x4000, scoped, tag = 'scratch operand']
  #allocation4 [shape = 'f32[1,1]{1,0:T(1,128)}', space=vmem, size = 0x200, scoped, tag = 'scratch operand']
  #allocation5 [shape = 'f32[1,1]{1,0:T(1,128)}', space=vmem, size = 0x200, scoped, tag = 'scratch operand']
  #allocation6 [shape = 'f32[1,1]{1,0:T(1,128)}', space=vmem, size = 0x200, scoped, tag = 'scratch operand']
  %s0 = inlined_call_operand.hbm [shape: f32[2,32,8], index: 0, kind: input, shape index: {}]
  %s1 = inlined_call_operand.hbm [shape: f32[2,32,8], index: 1, kind: input, shape index: {}]
  %s2 = inlined_call_operand.hbm [shape: f32[16,8], index: 2, kind: input, shape index: {}]
  %s3 = inlined_call_operand.hbm [shape: f32[8,128], index: 3, kind: input, shape index: {}]
  %s4 = inlined_call_operand.hbm [shape: s32[2,16,128], index: 4, kind: input, shape index: {}]
  %s5 = inlined_call_operand.hbm [shape: f32[2,8,128], index: 5, kind: output, shape index: {}]
  %s6 = sld [smem:[#allocation0]]
  $region81: #{tpu_custom_call.1} parent=0
    _
  %s8 = ssub.s32 1, %s6
  %s9 = scalar_select 0, %s8, %s6
  $region1: #{tpu_custom_call.1} parent=0
    #allocation7 [shape = 'u8[32768]{0}', space=vmem, size = 0x8000, scoped, tag = 'input window, operand 0']
    #allocation8 [shape = 's32[2]{0}', space=sflag, size = 0x8, scoped, tag = 'scoped memory for tpu_custom_call.1']
    #allocation9 [shape = 's32[2]{0}', space=sflag, size = 0x8, scoped, tag = 'scoped memory for tpu_custom_call.1']
    #allocation10 [shape = 'u8[32768]{0}', space=vmem, size = 0x8000, scoped, tag = 'input window, operand 1']
    #allocation11 [shape = 's32[2]{0}', space=sflag, size = 0x8, scoped, tag = 'scoped memory for tpu_custom_call.1']
    #allocation12 [shape = 'u8[8192]{0}', space=vmem, size = 0x2000, scoped, tag = 'input window, operand 2, single buffered']
    #allocation13 [shape = 'u8[4096]{0}', space=vmem, size = 0x1000, scoped, tag = 'input window, operand 3, single buffered']
    #allocation14 [shape = 's32[1]{0}', space=sflag, size = 0x4, scoped, tag = 'scoped memory for tpu_custom_call.1']
    #allocation15 [shape = 'u8[16384]{0}', space=vmem, size = 0x4000, scoped, tag = 'input window, operand 4']
    #allocation16 [shape = 'u8[8192]{0}', space=vmem, size = 0x2000, scoped, tag = 'output window, operand 0']
    %10 = vsyncpa [#allocation8], 0
    %s11 = scalar_lea.sflag [#allocation8], 1
    %12 = vsyncpa %s11, 0
    %13 = vsyncpa [#allocation11], 0
    %s14 = scalar_lea.sflag [#allocation11], 1
    %15 = vsyncpa %s14, 0
    %16 = vsyncpa [#allocation14], 0
    %17 = vsyncpa [#allocation9], 0
    %s18 = scalar_lea.sflag [#allocation9], 1
    %19 = vsyncpa %s18, 0
    loop: start=0, step=1, limit=4
    $region2: #{tpu_custom_call.1} parent=1 // loop_pre_header
      _
    $region3: #{tpu_custom_call.1} parent=1 // loop_header
      %s21 = sphi 0, %s25
      %p22 = scmp.ge.s32.totalorder %s21, 4
      %s28 = sphi 0, %s40
      %s29 = sphi 0, %s36
      %s30 = sphi 0, %s28
      %s31 = sphi 0, %s29
      %s32 = sphi 0, %s30
      %s33 = sphi 0, %s31
      %s43 = sphi 0, %s45
      %s46 = sphi 0, %s43
      %s47 = sphi 0, %s46
      %s63 = sphi 0, %s47
      %s69 = sphi 0, %s71
      %s72 = sphi 0, %s69
      %s73 = sphi 0, %s72
      %s89 = sphi 0, %s73
      %s95 = sphi 0, %s97
      %s98 = sphi 0, %s95
      %s99 = sphi 0, %s98
      %s115 = sphi 0, %s99
      %s119 = sphi 0, %s119
      %s121 = sphi 0, %s119
      %s122 = sphi 0, %s121
      %s136 = sphi 0, %s122
      %s144 = sphi 0, %s146
      %s147 = sphi 0, %s144
      %s148 = sphi 0, %s147
      %s164 = sphi 0, %s148
      %s170 = sphi 0, %s172
      %s173 = sphi 0, %s170
      %s174 = sphi 0, %s173
      %s190 = sphi 0, %s174
    $region4: #{tpu_custom_call.1} parent=1 // loop_header_branch
      %24 = sbr.rel (%p22) target = $region8
    $region5: #{tpu_custom_call.1} parent=1 // loop_body
      %s26 = ssub.s32 %s21, 1
      %s27 = ssub.s32 %s21, 2
      %s34 = sadd.s32 1, %s29
      %p35 = scmp.ge.s32.totalorder %s34, 1
      %s36 = scalar_select %p35, 0, %s34
      %s37 = sadd.s32 1, %s28
      %s38 = scalar_select %p35, %s37, %s28
      %p39 = scmp.ge.s32.totalorder %s38, 2
      %s40 = scalar_select %p39, 0, %s38
      %s41 = ssub.s32 %s28, %s40
      %p42 = scmp.eq.s32.totalorder %s41, 0
      %s44 = sadd.s32 %s43, 1
      %s45 = scalar_select %p42, %s43, %s44
      %p48 = pneg %p42
      %p49 = scmp.eq.s32.totalorder %s21, 1
      %p50 = por %p48, %p49
      %p51 = scmp.ne.s32.totalorder %s43, %s46
      %p52 = scmp.eq.s32.totalorder %s21, 0
      %p53 = por %p51, %p52
      %p54 = scmp.ne.s32.totalorder %s43, %s46
      %p55 = scmp.eq.s32.totalorder %s26, 1
      %p56 = por %p54, %p55
      %p57 = scmp.ne.s32.totalorder %s46, %s47
      %p58 = scmp.eq.s32.totalorder %s26, 0
      %p59 = por %p57, %p58
      %p60 = scmp.ne.s32.totalorder %s46, %s47
      %p61 = scmp.eq.s32.totalorder %s27, 1
      %p62 = por %p60, %p61
      %p64 = scmp.ne.s32.totalorder %s47, %s63
      %p65 = scmp.eq.s32.totalorder %s27, 0
      %p66 = por %p64, %p65
      %s67 = ssub.s32 %s28, %s40
      %p68 = scmp.eq.s32.totalorder %s67, 0
      %s70 = sadd.s32 %s69, 1
      %s71 = scalar_select %p68, %s69, %s70
      %p74 = pneg %p68
      %p75 = scmp.eq.s32.totalorder %s21, 1
      %p76 = por %p74, %p75
      %p77 = scmp.ne.s32.totalorder %s69, %s72
      %p78 = scmp.eq.s32.totalorder %s21, 0
      %p79 = por %p77, %p78
      %p80 = scmp.ne.s32.totalorder %s69, %s72
      %p81 = scmp.eq.s32.totalorder %s26, 1
      %p82 = por %p80, %p81
      %p83 = scmp.ne.s32.totalorder %s72, %s73
      %p84 = scmp.eq.s32.totalorder %s26, 0
      %p85 = por %p83, %p84
      %p86 = scmp.ne.s32.totalorder %s72, %s73
      %p87 = scmp.eq.s32.totalorder %s27, 1
      %p88 = por %p86, %p87
      %p90 = scmp.ne.s32.totalorder %s73, %s89
      %p91 = scmp.eq.s32.totalorder %s27, 0
      %p92 = por %p90, %p91
      %s93 = ssub.s32 %s29, %s36
      %p94 = scmp.eq.s32.totalorder %s93, 0
      %s96 = sadd.s32 %s95, 1
      %s97 = scalar_select %p94, %s95, %s96
      %p100 = pneg %p94
      %p101 = scmp.eq.s32.totalorder %s21, 1
      %p102 = por %p100, %p101
      %p103 = scmp.ne.s32.totalorder %s95, %s98
      %p104 = scmp.eq.s32.totalorder %s21, 0
      %p105 = por %p103, %p104
      %p106 = scmp.ne.s32.totalorder %s95, %s98
      %p107 = scmp.eq.s32.totalorder %s26, 1
      %p108 = por %p106, %p107
      %p109 = scmp.ne.s32.totalorder %s98, %s99
      %p110 = scmp.eq.s32.totalorder %s26, 0
      %p111 = por %p109, %p110
      %p112 = scmp.ne.s32.totalorder %s98, %s99
      %p113 = scmp.eq.s32.totalorder %s27, 1
      %p114 = por %p112, %p113
      %p116 = scmp.ne.s32.totalorder %s99, %s115
      %p117 = scmp.eq.s32.totalorder %s27, 0
      %p118 = por %p116, %p117
      %s120 = sadd.s32 %s119, 1
      %p123 = scmp.eq.s32.totalorder %s21, 1
      %p124 = scmp.ne.s32.totalorder %s119, %s121
      %p125 = scmp.eq.s32.totalorder %s21, 0
      %p126 = por %p124, %p125
      %p127 = scmp.ne.s32.totalorder %s119, %s121
      %p128 = scmp.eq.s32.totalorder %s26, 1
      %p129 = por %p127, %p128
      %p130 = scmp.ne.s32.totalorder %s121, %s122
      %p131 = scmp.eq.s32.totalorder %s26, 0
      %p132 = por %p130, %p131
      %p133 = scmp.ne.s32.totalorder %s121, %s122
      %p134 = scmp.eq.s32.totalorder %s27, 1
      %p135 = por %p133, %p134
      %p137 = scmp.ne.s32.totalorder %s122, %s136
      %p138 = scmp.eq.s32.totalorder %s27, 0
      %p139 = por %p137, %p138
      %s140 = ssub.s32 %s28, %s40
      %s141 = ssub.s32 %s29, %s36
      %s142 = sor.u32 %s140, %s141
      %p143 = scmp.eq.s32.totalorder %s142, 0
      %s145 = sadd.s32 %s144, 1
      %s146 = scalar_select %p143, %s144, %s145
      %p149 = pneg %p143
      %p150 = scmp.eq.s32.totalorder %s21, 1
      %p151 = por %p149, %p150
      %p152 = scmp.ne.s32.totalorder %s144, %s147
      %p153 = scmp.eq.s32.totalorder %s21, 0
      %p154 = por %p152, %p153
      %p155 = scmp.ne.s32.totalorder %s144, %s147
      %p156 = scmp.eq.s32.totalorder %s26, 1
      %p157 = por %p155, %p156
      %p158 = scmp.ne.s32.totalorder %s147, %s148
      %p159 = scmp.eq.s32.totalorder %s26, 0
      %p160 = por %p158, %p159
      %p161 = scmp.ne.s32.totalorder %s147, %s148
      %p162 = scmp.eq.s32.totalorder %s27, 1
      %p163 = por %p161, %p162
      %p165 = scmp.ne.s32.totalorder %s148, %s164
      %p166 = scmp.eq.s32.totalorder %s27, 0
      %p167 = por %p165, %p166
      %s168 = ssub.s32 %s28, %s40
      %p169 = scmp.eq.s32.totalorder %s168, 0
      %s171 = sadd.s32 %s170, 1
      %s172 = scalar_select %p169, %s170, %s171
      %p175 = pneg %p169
      %p176 = scmp.eq.s32.totalorder %s21, 1
      %p177 = por %p175, %p176
      %p178 = scmp.ne.s32.totalorder %s170, %s173
      %p179 = scmp.eq.s32.totalorder %s21, 0
      %p180 = por %p178, %p179
      %p181 = scmp.ne.s32.totalorder %s170, %s173
      %p182 = scmp.eq.s32.totalorder %s26, 1
      %p183 = por %p181, %p182
      %p184 = scmp.ne.s32.totalorder %s173, %s174
      %p185 = scmp.eq.s32.totalorder %s26, 0
      %p186 = por %p184, %p185
      %p187 = scmp.ne.s32.totalorder %s173, %s174
      %p188 = scmp.eq.s32.totalorder %s27, 1
      %p189 = por %p187, %p188
      %p191 = scmp.ne.s32.totalorder %s174, %s190
      %p192 = scmp.eq.s32.totalorder %s27, 0
      %p193 = por %p191, %p192
      %p194 = scmp.le.s32.totalorder 1, %s21
      %p195 = scmp.lt.s32.totalorder %s21, 3
      %p196 = pnand %p194, %p195
      %p197 = pneg %p196
      // Predicated region
      $region9: #{tpu_custom_call.1} parent=5 // pred_check
        _
      $region10: #{tpu_custom_call.1} parent=5 // pred_check_branch
        %199 = sbr.rel (%p196) target = $region12
      $region11: #{tpu_custom_call.1} parent=5 // pred_region
        %s200 = ssub.s32 %s21, 1
        // Predicated region
        $region13: #{tpu_custom_call.1} parent=11 // pred_check
          %p201 = pneg %p111
        $region14: #{tpu_custom_call.1} parent=11 // pred_check_branch
          %203 = sbr.rel (%p201) target = $region16
        $region15: #{tpu_custom_call.1} parent=11 // pred_region
          %s204 = smul.u32 2, %s31
          %s206 = ssub.s32 256, 256
          %207 = vsyncadd [#allocation11], %s206
          %s208 = smul.addr %s204, 128
          %s209 = scalar_lea.hbm %s2, %s208
          %s210 = sshll.u32 [#allocation12], 4
          %s211 = int_to_ptr.vmem [resolvable:$true] %s210
          %216 = dma.hbm_to_vmem [thread:$0]  %s209, 256, %s211, [#allocation11], 128, 128, 8
        $region16: #{tpu_custom_call.1} parent=11 // pred_fallthru
          _
        // Predicated region
        $region17: #{tpu_custom_call.1} parent=11 // pred_check
          %p217 = pneg %p132
        $region18: #{tpu_custom_call.1} parent=11 // pred_check_branch
          %219 = sbr.rel (%p217) target = $region20
        $region19: #{tpu_custom_call.1} parent=11 // pred_region
          %s221 = ssub.s32 128, 128
          %222 = vsyncadd [#allocation14], %s221
          %s224 = sshll.u32 [#allocation13], 4
          %s225 = int_to_ptr.vmem [resolvable:$true] %s224
          %227 = dma.hbm_to_vmem [thread:$0]  %s3, 128, %s225, [#allocation14]
        $region20: #{tpu_custom_call.1} parent=11 // pred_fallthru
          _
      $region12: #{tpu_custom_call.1} parent=5 // pred_fallthru
        _
      %p228 = scmp.lt.s32.totalorder %s21, 2
      // Predicated region
      $region21: #{tpu_custom_call.1} parent=5 // pred_check
        %p229 = pneg %p228
      $region22: #{tpu_custom_call.1} parent=5 // pred_check_branch
        %231 = sbr.rel (%p229) target = $region24
      $region23: #{tpu_custom_call.1} parent=5 // pred_region
        // Predicated region
        $region25: #{tpu_custom_call.1} parent=23 // pred_check
          %p232 = pneg %p53
        $region26: #{tpu_custom_call.1} parent=23 // pred_check_branch
          %234 = sbr.rel (%p232) target = $region28
        $region27: #{tpu_custom_call.1} parent=23 // pred_region
          %s235 = sand.u32 %s21, 1
          %s236 = scalar_lea.sflag [#allocation8], %s235
          %s237 = sand.u32 %s43, 1
          %s238 = smul.addr %s237, 32
          %s239 = scalar_lea.vmem [#allocation7], %s238
          %s241 = ssub.s32 512, 512
          %242 = vsyncadd %s236, %s241
          %s243 = smul.addr %s28, 4
          %s244 = smul.addr %s243, 128
          %s245 = scalar_lea.hbm %s0, %s244
          %s246 = sshll.u32 %s239, 4
          %s247 = int_to_ptr.vmem [resolvable:$true] %s246
          %252 = dma.hbm_to_vmem [thread:$0]  %s245, 512, %s247, %s236, 128, 128, 8
        $region28: #{tpu_custom_call.1} parent=23 // pred_fallthru
          _
        // Predicated region
        $region29: #{tpu_custom_call.1} parent=23 // pred_check
          %p253 = pneg %p79
        $region30: #{tpu_custom_call.1} parent=23 // pred_check_branch
          %255 = sbr.rel (%p253) target = $region32
        $region31: #{tpu_custom_call.1} parent=23 // pred_region
          %s256 = sand.u32 %s21, 1
          %s257 = scalar_lea.sflag [#allocation11], %s256
          %s258 = sand.u32 %s69, 1
          %s259 = smul.addr %s258, 32
          %s260 = scalar_lea.vmem [#allocation10], %s259
          %s262 = ssub.s32 512, 512
          %263 = vsyncadd %s257, %s262
          %s264 = smul.addr %s28, 4
          %s265 = smul.addr %s264, 128
          %s266 = scalar_lea.hbm %s1, %s265
          %s267 = sshll.u32 %s260, 4
          %s268 = int_to_ptr.vmem [resolvable:$true] %s267
          %273 = dma.hbm_to_vmem [thread:$0]  %s266, 512, %s268, %s257, 128, 128, 8
        $region32: #{tpu_custom_call.1} parent=23 // pred_fallthru
          _
        // Predicated region
        $region33: #{tpu_custom_call.1} parent=23 // pred_check
          %p274 = pneg %p154
        $region34: #{tpu_custom_call.1} parent=23 // pred_check_branch
          %276 = sbr.rel (%p274) target = $region36
        $region35: #{tpu_custom_call.1} parent=23 // pred_region
          %s277 = sand.u32 %s21, 1
          %s278 = scalar_lea.sflag [#allocation8], %s277
          %s279 = sand.u32 %s144, 1
          %s280 = smul.addr %s279, 16
          %s281 = scalar_lea.vmem [#allocation15], %s280
          %s282 = smul.u32 2, %s29
          %s284 = ssub.s32 256, 256
          %285 = vsyncadd %s278, %s284
          %s286 = smul.addr %s28, 2
          %s287 = sadd.s32 %s282, %s286
          %s288 = smul.addr %s287, 128
          %s289 = scalar_lea.hbm %s4, %s288
          %s290 = sshll.u32 %s281, 4
          %s291 = int_to_ptr.vmem [resolvable:$true] %s290
          %296 = dma.hbm_to_vmem [thread:$0]  %s289, 256, %s291, %s278, 128, 128, 8
        $region36: #{tpu_custom_call.1} parent=23 // pred_fallthru
          _
      $region24: #{tpu_custom_call.1} parent=5 // pred_fallthru
        _
      %p297 = scmp.le.s32.totalorder 1, %s21
      %p298 = scmp.lt.s32.totalorder %s21, 3
      %p299 = pnand %p297, %p298
      %p300 = pneg %p299
      // Predicated region
      $region37: #{tpu_custom_call.1} parent=5 // pred_check
        _
      $region38: #{tpu_custom_call.1} parent=5 // pred_check_branch
        %302 = sbr.rel (%p299) target = $region40
      $region39: #{tpu_custom_call.1} parent=5 // pred_region
        %s303 = ssub.s32 %s21, 1
        %s304 = sand.u32 %s26, 1
        %s305 = scalar_lea.sflag [#allocation8], %s304
        %s306 = sand.u32 %s46, 1
        %s307 = smul.addr %s306, 32
        %s308 = scalar_lea.vmem [#allocation7], %s307
        // Predicated region
        $region41: #{tpu_custom_call.1} parent=39 // pred_check
          %p309 = pneg %p59
        $region42: #{tpu_custom_call.1} parent=39 // pred_check_branch
          %311 = sbr.rel (%p309) target = $region44
        $region43: #{tpu_custom_call.1} parent=39 // pred_region
          %312 = dma.done %s305, 512
        $region44: #{tpu_custom_call.1} parent=39 // pred_fallthru
          _
        %s313 = sand.u32 %s26, 1
        %s314 = scalar_lea.sflag [#allocation11], %s313
        %s315 = sand.u32 %s72, 1
        %s316 = smul.addr %s315, 32
        %s317 = scalar_lea.vmem [#allocation10], %s316
        // Predicated region
        $region45: #{tpu_custom_call.1} parent=39 // pred_check
          %p318 = pneg %p85
        $region46: #{tpu_custom_call.1} parent=39 // pred_check_branch
          %320 = sbr.rel (%p318) target = $region48
        $region47: #{tpu_custom_call.1} parent=39 // pred_region
          %321 = dma.done %s314, 512
        $region48: #{tpu_custom_call.1} parent=39 // pred_fallthru
          _
        // Predicated region
        $region49: #{tpu_custom_call.1} parent=39 // pred_check
          %p322 = pneg %p111
        $region50: #{tpu_custom_call.1} parent=39 // pred_check_branch
          %324 = sbr.rel (%p322) target = $region52
        $region51: #{tpu_custom_call.1} parent=39 // pred_region
          %325 = dma.done [#allocation11], 256
        $region52: #{tpu_custom_call.1} parent=39 // pred_fallthru
          _
        // Predicated region
        $region53: #{tpu_custom_call.1} parent=39 // pred_check
          %p326 = pneg %p132
        $region54: #{tpu_custom_call.1} parent=39 // pred_check_branch
          %328 = sbr.rel (%p326) target = $region56
        $region55: #{tpu_custom_call.1} parent=39 // pred_region
          %329 = dma.done [#allocation14], 128
        $region56: #{tpu_custom_call.1} parent=39 // pred_fallthru
          _
        %s330 = sand.u32 %s26, 1
        %s331 = scalar_lea.sflag [#allocation8], %s330
        %s332 = sand.u32 %s147, 1
        %s333 = smul.addr %s332, 16
        %s334 = scalar_lea.vmem [#allocation15], %s333
        // Predicated region
        $region57: #{tpu_custom_call.1} parent=39 // pred_check
          %p335 = pneg %p160
        $region58: #{tpu_custom_call.1} parent=39 // pred_check_branch
          %337 = sbr.rel (%p335) target = $region60
        $region59: #{tpu_custom_call.1} parent=39 // pred_region
          %338 = dma.done %s331, 256
        $region60: #{tpu_custom_call.1} parent=39 // pred_fallthru
          _
        %s339 = sand.u32 %s26, 1
        %s340 = scalar_lea.sflag [#allocation8], %s339
        %s341 = sand.u32 %s46, 1
        %s342 = smul.addr %s341, 32
        %s343 = scalar_lea.vmem [#allocation7], %s342
        %p344 = pneg %p59
        %p345 = pneg %p56
        %s346 = sand.u32 %s26, 1
        %s347 = scalar_lea.sflag [#allocation11], %s346
        %s348 = sand.u32 %s72, 1
        %s349 = smul.addr %s348, 32
        %s350 = scalar_lea.vmem [#allocation10], %s349
        %p351 = pneg %p85
        %p352 = pneg %p82
        %p353 = pneg %p111
        %p354 = pneg %p108
        %p355 = pneg %p132
        %p356 = pneg %p129
        %s357 = sand.u32 %s26, 1
        %s358 = scalar_lea.sflag [#allocation8], %s357
        %s359 = sand.u32 %s147, 1
        %s360 = smul.addr %s359, 16
        %s361 = scalar_lea.vmem [#allocation15], %s360
        %p362 = pneg %p160
        %p363 = pneg %p157
        %p364 = pneg %p186
        %p365 = pneg %p183
        %s366 = sand.u32 %s173, 1
        %s367 = scalar_lea.sflag [#allocation9], %s366
        %s368 = sand.u32 %s173, 1
        %s369 = smul.addr %s368, 8
        %s370 = scalar_lea.vmem [#allocation16], %s369
        %s371 = smul.u32 2, %s31
        %s372 = smul.u32 2, %s31
        %p373 = scmp.eq.s32.totalorder %s31, 0
        // Predicated region
        $region61: #{tpu_custom_call.1} parent=39 // pred_check
          %p374 = pneg %p373
        $region62: #{tpu_custom_call.1} parent=39 // pred_check_branch
          %376 = sbr.rel (%p374) target = $region64
        $region63: #{tpu_custom_call.1} parent=39 // pred_region
          %v377 = vld [vmem:[#allocation13] sm:$0xff]
          %v378 = vld [vmem:[%s308] sm:$0xff]
          %v379 = vld [vmem:[%s308 + $0x8] sm:$0xff]
          %v380 = vld [vmem:[%s308 + $0x10] sm:$0xff]
          %v381 = vld [vmem:[%s308 + $0x18] sm:$0xff]
          %vm382 = vcmask 64512
          %v384 = vsel %vm382, %v378, 0
          %v387 = vsel %vm382, %v379, 0
          %v390 = vsel %vm382, %v380, 0
          %v393 = vsel %vm382, %v381, 0
          %395 = vmatprep.subr.mxu0 0.0
          %396 = vmatpush1.msra.mxu0 %v377
          %397 = vmatprep.subr.mxu0 0.0
          %398 = vmatpush1.msra.mxu0 0.0
          %399 = vmatprep.subr.mxu0 0.0
          %400 = vmatpush1.msra.mxu0 0.0
          %401 = vmatprep.subr.mxu0 0.0
          %402 = vmatpush1.msra.mxu0 0.0
          %403 = vmatprep.subr.mxu0 0.0
          %404 = vmatpush1.msra.mxu0 0.0
          %405 = vmatprep.subr.mxu0 0.0
          %406 = vmatpush1.msra.mxu0 0.0
          %407 = vmatprep.subr.mxu0 0.0
          %408 = vmatpush1.msra.mxu0 0.0
          %409 = vmatprep.subr.mxu0 0.0
          %410 = vmatpush1.msra.mxu0 0.0
          %411 = vmatprep.subr.mxu0 0.0
          %412 = vmatpush1.msra.mxu0 0.0
          %413 = vmatprep.subr.mxu0 0.0
          %414 = vmatpush1.msra.mxu0 0.0
          %415 = vmatprep.subr.mxu0 0.0
          %416 = vmatpush1.msra.mxu0 0.0
          %417 = vmatprep.subr.mxu0 0.0
          %418 = vmatpush1.msra.mxu0 0.0
          %419 = vmatprep.subr.mxu0 0.0
          %420 = vmatpush1.msra.mxu0 0.0
          %421 = vmatprep.subr.mxu0 0.0
          %422 = vmatpush1.msra.mxu0 0.0
          %423 = vmatprep.subr.mxu0 0.0
          %424 = vmatpush1.msra.mxu0 0.0
          %425 = vmatprep.subr.mxu0 0.0
          %426 = vmatpush1.msra.mxu0 0.0
          %427 = vmatprep.subr.mxu0 0.0
          %428 = vmatpush1.msra.mxu0 0.0
          %429 = vmatprep.subr.mxu0 0.0
          %430 = vmatpush1.msra.mxu0 0.0
          %431 = vmatprep.subr.mxu0 0.0
          %432 = vmatpush1.msra.mxu0 0.0
          %433 = vmatprep.subr.mxu0 0.0
          %434 = vmatpush1.msra.mxu0 0.0
          %435 = vmatprep.subr.mxu0 0.0
          %436 = vmatpush1.msra.mxu0 0.0
          %437 = vmatprep.subr.mxu0 0.0
          %438 = vmatpush1.msra.mxu0 0.0
          %439 = vmatprep.subr.mxu0 0.0
          %440 = vmatpush1.msra.mxu0 0.0
          %441 = vmatprep.subr.mxu0 0.0
          %442 = vmatpush1.msra.mxu0 0.0
          %443 = vmatprep.subr.mxu0 0.0
          %444 = vmatpush1.msra.mxu0 0.0
          %445 = vmatprep.subr.mxu0 0.0
          %446 = vmatpush1.msra.mxu0 0.0
          %447 = vmatprep.subr.mxu0 0.0
          %448 = vmatpush1.msra.mxu0 0.0
          %449 = vmatprep.subr.mxu0 0.0
          %450 = vmatpush1.msra.mxu0 0.0
          %451 = vmatprep.subr.mxu0 0.0
          %452 = vmatpush1.msra.mxu0 0.0
          %453 = vmatprep.subr.mxu0 0.0
          %454 = vmatpush1.msra.mxu0 0.0
          %455 = vmatprep.subr.mxu0 0.0
          %456 = vmatpush1.msra.mxu0 0.0
          %457 = vmatprep.subr.mxu0 0.0
          %458 = vmatpush1.msra.mxu0 0.0
          %459 = vmatprep.mubr.f32.mxu0 0.0
          %460 = vmatmul.mubr.f32.gmra.mrb[0].mxu0 %v384
          %v461 = vpop.f32.mrb[0].mxu0
          %v462 = vadd.f32 0.0, %v461
          %v463 = vpop.f32.mrb[0].mxu0
          %464 = vmatprep.mubr.f32.mxu0 0.0
          %465 = vmatmul.mubr.f32.gmra.mrb[0].mxu0 %v387
          %v466 = vpop.f32.mrb[0].mxu0
          %v467 = vadd.f32 0.0, %v466
          %v468 = vpop.f32.mrb[0].mxu0
          %469 = vmatprep.mubr.f32.mxu0 0.0
          %470 = vmatmul.mubr.f32.gmra.mrb[0].mxu0 %v390
          %v471 = vpop.f32.mrb[0].mxu0
          %v472 = vadd.f32 0.0, %v471
          %v473 = vpop.f32.mrb[0].mxu0
          %474 = vmatprep.mubr.f32.mxu0 0.0
          %475 = vmatmul.mubr.f32.gmra.mrb[0].mxu0 %v393
          %v476 = vpop.f32.mrb[0].mxu0
          %v477 = vadd.f32 0.0, %v476
          %v478 = vpop.f32.mrb[0].mxu0
          %479 = vdwg.mxu0
          %480 = vst [vmem:[#allocation2] sm:$0xff] %v462
          %481 = vst [vmem:[#allocation2 + $0x8] sm:$0xff] %v467
          %482 = vst [vmem:[#allocation2 + $0x10] sm:$0xff] %v472
          %483 = vst [vmem:[#allocation2 + $0x18] sm:$0xff] %v477
          %v484 = vld [vmem:[%s317] sm:$0xff]
          %v485 = vld [vmem:[%s317 + $0x8] sm:$0xff]
          %v486 = vld [vmem:[%s317 + $0x10] sm:$0xff]
          %v487 = vld [vmem:[%s317 + $0x18] sm:$0xff]
          %v489 = vsel %vm382, %v484, 0
          %v492 = vsel %vm382, %v485, 0
          %v495 = vsel %vm382, %v486, 0
          %v498 = vsel %vm382, %v487, 0
          %500 = vmatprep.subr.mxu0 0.0
          %501 = vmatpush1.msra.mxu0 %v377
          %502 = vmatprep.subr.mxu0 0.0
          %503 = vmatpush1.msra.mxu0 0.0
          %504 = vmatprep.subr.mxu0 0.0
          %505 = vmatpush1.msra.mxu0 0.0
          %506 = vmatprep.subr.mxu0 0.0
          %507 = vmatpush1.msra.mxu0 0.0
          %508 = vmatprep.subr.mxu0 0.0
          %509 = vmatpush1.msra.mxu0 0.0
          %510 = vmatprep.subr.mxu0 0.0
          %511 = vmatpush1.msra.mxu0 0.0
          %512 = vmatprep.subr.mxu0 0.0
          %513 = vmatpush1.msra.mxu0 0.0
          %514 = vmatprep.subr.mxu0 0.0
          %515 = vmatpush1.msra.mxu0 0.0
          %516 = vmatprep.subr.mxu0 0.0
          %517 = vmatpush1.msra.mxu0 0.0
          %518 = vmatprep.subr.mxu0 0.0
          %519 = vmatpush1.msra.mxu0 0.0
          %520 = vmatprep.subr.mxu0 0.0
          %521 = vmatpush1.msra.mxu0 0.0
          %522 = vmatprep.subr.mxu0 0.0
          %523 = vmatpush1.msra.mxu0 0.0
          %524 = vmatprep.subr.mxu0 0.0
          %525 = vmatpush1.msra.mxu0 0.0
          %526 = vmatprep.subr.mxu0 0.0
          %527 = vmatpush1.msra.mxu0 0.0
          %528 = vmatprep.subr.mxu0 0.0
          %529 = vmatpush1.msra.mxu0 0.0
          %530 = vmatprep.subr.mxu0 0.0
          %531 = vmatpush1.msra.mxu0 0.0
          %532 = vmatprep.subr.mxu0 0.0
          %533 = vmatpush1.msra.mxu0 0.0
          %534 = vmatprep.subr.mxu0 0.0
          %535 = vmatpush1.msra.mxu0 0.0
          %536 = vmatprep.subr.mxu0 0.0
          %537 = vmatpush1.msra.mxu0 0.0
          %538 = vmatprep.subr.mxu0 0.0
          %539 = vmatpush1.msra.mxu0 0.0
          %540 = vmatprep.subr.mxu0 0.0
          %541 = vmatpush1.msra.mxu0 0.0
          %542 = vmatprep.subr.mxu0 0.0
          %543 = vmatpush1.msra.mxu0 0.0
          %544 = vmatprep.subr.mxu0 0.0
          %545 = vmatpush1.msra.mxu0 0.0
          %546 = vmatprep.subr.mxu0 0.0
          %547 = vmatpush1.msra.mxu0 0.0
          %548 = vmatprep.subr.mxu0 0.0
          %549 = vmatpush1.msra.mxu0 0.0
          %550 = vmatprep.subr.mxu0 0.0
          %551 = vmatpush1.msra.mxu0 0.0
          %552 = vmatprep.subr.mxu0 0.0
          %553 = vmatpush1.msra.mxu0 0.0
          %554 = vmatprep.subr.mxu0 0.0
          %555 = vmatpush1.msra.mxu0 0.0
          %556 = vmatprep.subr.mxu0 0.0
          %557 = vmatpush1.msra.mxu0 0.0
          %558 = vmatprep.subr.mxu0 0.0
          %559 = vmatpush1.msra.mxu0 0.0
          %560 = vmatprep.subr.mxu0 0.0
          %561 = vmatpush1.msra.mxu0 0.0
          %562 = vmatprep.subr.mxu0 0.0
          %563 = vmatpush1.msra.mxu0 0.0
          %564 = vmatprep.mubr.f32.mxu0 0.0
          %565 = vmatmul.mubr.f32.gmra.mrb[0].mxu0 %v489
          %v566 = vpop.f32.mrb[0].mxu0
          %v567 = vadd.f32 0.0, %v566
          %v568 = vpop.f32.mrb[0].mxu0
          %569 = vmatprep.mubr.f32.mxu0 0.0
          %570 = vmatmul.mubr.f32.gmra.mrb[0].mxu0 %v492
          %v571 = vpop.f32.mrb[0].mxu0
          %v572 = vadd.f32 0.0, %v571
          %v573 = vpop.f32.mrb[0].mxu0
          %574 = vmatprep.mubr.f32.mxu0 0.0
          %575 = vmatmul.mubr.f32.gmra.mrb[0].mxu0 %v495
          %v576 = vpop.f32.mrb[0].mxu0
          %v577 = vadd.f32 0.0, %v576
          %v578 = vpop.f32.mrb[0].mxu0
          %579 = vmatprep.mubr.f32.mxu0 0.0
          %580 = vmatmul.mubr.f32.gmra.mrb[0].mxu0 %v498
          %v581 = vpop.f32.mrb[0].mxu0
          %v582 = vadd.f32 0.0, %v581
          %v583 = vpop.f32.mrb[0].mxu0
          %584 = vdwg.mxu0
          %585 = vst [vmem:[#allocation3] sm:$0xff] %v567
          %586 = vst [vmem:[#allocation3 + $0x8] sm:$0xff] %v572
          %587 = vst [vmem:[#allocation3 + $0x10] sm:$0xff] %v577
          %588 = vst [vmem:[#allocation3 + $0x18] sm:$0xff] %v582
          %vm589 = vcmask 0
          %590 = vst.msk [vmem:[#allocation4] sm:$0x1] %vm589, 0.0
          %591 = vst.msk [vmem:[#allocation5] sm:$0x1] %vm589, 0.0
          %592 = vst.msk [vmem:[#allocation6] sm:$0x1] %vm589, 0.0
        $region64: #{tpu_custom_call.1} parent=39 // pred_fallthru
          _
        %v593 = vld [vmem:[#allocation12] sm:$0xff]
        %v594 = vld [vmem:[#allocation12 + $0x8] sm:$0xff]
        %v595 = vld [vmem:[%s334] sm:$0xff]
        %v596 = vld [vmem:[%s334 + $0x8] sm:$0xff]
        %vm597 = vcmp.ne.s32.totalorder %v595, 4294967295
        %vm598 = vcmp.ne.s32.totalorder %v596, 4294967295
        %v599 = vsel %vm597, 1, 0
        %v600 = vsel %vm598, 1, 0
        %v601 = vcvt.s32.f32 %v599
        %v602 = vcvt.s32.f32 %v600
        %v603 = vld [vmem:[#allocation4] sm:$0x1]
        %v604 = vld [vmem:[#allocation2] sm:$0xff]
        %vm605 = vcmask 64512
        %v607 = vsel %vm605, %v593, 0
        %v610 = vsel %vm605, %v594, 0
        %612 = vmatprep.subr.mxu0 0.0
        %613 = vmatpush1.msra.mxu0 %v604
        %614 = vmatprep.subr.mxu0 0.0
        %615 = vmatpush1.msra.mxu0 0.0
        %616 = vmatprep.subr.mxu0 0.0
        %617 = vmatpush1.msra.mxu0 0.0
        %618 = vmatprep.subr.mxu0 0.0
        %619 = vmatpush1.msra.mxu0 0.0
        %620 = vmatprep.subr.mxu0 0.0
        %621 = vmatpush1.msra.mxu0 0.0
        %622 = vmatprep.subr.mxu0 0.0
        %623 = vmatpush1.msra.mxu0 0.0
        %624 = vmatprep.subr.mxu0 0.0
        %625 = vmatpush1.msra.mxu0 0.0
        %626 = vmatprep.subr.mxu0 0.0
        %627 = vmatpush1.msra.mxu0 0.0
        %628 = vmatprep.subr.mxu0 0.0
        %629 = vmatpush1.msra.mxu0 0.0
        %630 = vmatprep.subr.mxu0 0.0
        %631 = vmatpush1.msra.mxu0 0.0
        %632 = vmatprep.subr.mxu0 0.0
        %633 = vmatpush1.msra.mxu0 0.0
        %634 = vmatprep.subr.mxu0 0.0
        %635 = vmatpush1.msra.mxu0 0.0
        %636 = vmatprep.subr.mxu0 0.0
        %637 = vmatpush1.msra.mxu0 0.0
        %638 = vmatprep.subr.mxu0 0.0
        %639 = vmatpush1.msra.mxu0 0.0
        %640 = vmatprep.subr.mxu0 0.0
        %641 = vmatpush1.msra.mxu0 0.0
        %642 = vmatprep.subr.mxu0 0.0
        %643 = vmatpush1.msra.mxu0 0.0
        %644 = vmatprep.subr.mxu0 0.0
        %645 = vmatpush1.msra.mxu0 0.0
        %646 = vmatprep.subr.mxu0 0.0
        %647 = vmatpush1.msra.mxu0 0.0
        %648 = vmatprep.subr.mxu0 0.0
        %649 = vmatpush1.msra.mxu0 0.0
        %650 = vmatprep.subr.mxu0 0.0
        %651 = vmatpush1.msra.mxu0 0.0
        %652 = vmatprep.subr.mxu0 0.0
        %653 = vmatpush1.msra.mxu0 0.0
        %654 = vmatprep.subr.mxu0 0.0
        %655 = vmatpush1.msra.mxu0 0.0
        %656 = vmatprep.subr.mxu0 0.0
        %657 = vmatpush1.msra.mxu0 0.0
        %658 = vmatprep.subr.mxu0 0.0
        %659 = vmatpush1.msra.mxu0 0.0
        %660 = vmatprep.subr.mxu0 0.0
        %661 = vmatpush1.msra.mxu0 0.0
        %662 = vmatprep.subr.mxu0 0.0
        %663 = vmatpush1.msra.mxu0 0.0
        %664 = vmatprep.subr.mxu0 0.0
        %665 = vmatpush1.msra.mxu0 0.0
        %666 = vmatprep.subr.mxu0 0.0
        %667 = vmatpush1.msra.mxu0 0.0
        %668 = vmatprep.subr.mxu0 0.0
        %669 = vmatpush1.msra.mxu0 0.0
        %670 = vmatprep.subr.mxu0 0.0
        %671 = vmatpush1.msra.mxu0 0.0
        %672 = vmatprep.subr.mxu0 0.0
        %673 = vmatpush1.msra.mxu0 0.0
        %674 = vmatprep.subr.mxu0 0.0
        %675 = vmatpush1.msra.mxu0 0.0
        %676 = vmatprep.mubr.f32.mxu0 0.0
        %677 = vmatmul.mubr.f32.gmra.mrb[0].mxu0 %v607
        %v678 = vpop.f32.mrb[0].mxu0
        %v679 = vadd.f32 0.0, %v678
        %v680 = vpop.f32.mrb[0].mxu0
        %681 = vmatprep.mubr.f32.mxu0 0.0
        %682 = vmatmul.mubr.f32.gmra.mrb[0].mxu0 %v610
        %v683 = vpop.f32.mrb[0].mxu0
        %v684 = vadd.f32 0.0, %v683
        %v685 = vpop.f32.mrb[0].mxu0
        %686 = vdwg.mxu0
        %vm687 = vcmp.eq.s32.totalorder %v595, 0
        %vm688 = vcmp.eq.s32.totalorder %v596, 0
        %v689 = vsel %vm687, %v679, 0.0
        %v690 = vsel %vm688, %v684, 0.0
        %v691 = vld [vmem:[#allocation2 + $0x8] sm:$0xff]
        %692 = vmatprep.subr.mxu0 0.0
        %693 = vmatpush1.msra.mxu0 %v691
        %694 = vmatprep.subr.mxu0 0.0
        %695 = vmatpush1.msra.mxu0 0.0
        %696 = vmatprep.subr.mxu0 0.0
        %697 = vmatpush1.msra.mxu0 0.0
        %698 = vmatprep.subr.mxu0 0.0
        %699 = vmatpush1.msra.mxu0 0.0
        %700 = vmatprep.subr.mxu0 0.0
        %701 = vmatpush1.msra.mxu0 0.0
        %702 = vmatprep.subr.mxu0 0.0
        %703 = vmatpush1.msra.mxu0 0.0
        %704 = vmatprep.subr.mxu0 0.0
        %705 = vmatpush1.msra.mxu0 0.0
        %706 = vmatprep.subr.mxu0 0.0
        %707 = vmatpush1.msra.mxu0 0.0
        %708 = vmatprep.subr.mxu0 0.0
        %709 = vmatpush1.msra.mxu0 0.0
        %710 = vmatprep.subr.mxu0 0.0
        %711 = vmatpush1.msra.mxu0 0.0
        %712 = vmatprep.subr.mxu0 0.0
        %713 = vmatpush1.msra.mxu0 0.0
        %714 = vmatprep.subr.mxu0 0.0
        %715 = vmatpush1.msra.mxu0 0.0
        %716 = vmatprep.subr.mxu0 0.0
        %717 = vmatpush1.msra.mxu0 0.0
        %718 = vmatprep.subr.mxu0 0.0
        %719 = vmatpush1.msra.mxu0 0.0
        %720 = vmatprep.subr.mxu0 0.0
        %721 = vmatpush1.msra.mxu0 0.0
        %722 = vmatprep.subr.mxu0 0.0
        %723 = vmatpush1.msra.mxu0 0.0
        %724 = vmatprep.subr.mxu0 0.0
        %725 = vmatpush1.msra.mxu0 0.0
        %726 = vmatprep.subr.mxu0 0.0
        %727 = vmatpush1.msra.mxu0 0.0
        %728 = vmatprep.subr.mxu0 0.0
        %729 = vmatpush1.msra.mxu0 0.0
        %730 = vmatprep.subr.mxu0 0.0
        %731 = vmatpush1.msra.mxu0 0.0
        %732 = vmatprep.subr.mxu0 0.0
        %733 = vmatpush1.msra.mxu0 0.0
        %734 = vmatprep.subr.mxu0 0.0
        %735 = vmatpush1.msra.mxu0 0.0
        %736 = vmatprep.subr.mxu0 0.0
        %737 = vmatpush1.msra.mxu0 0.0
        %738 = vmatprep.subr.mxu0 0.0
        %739 = vmatpush1.msra.mxu0 0.0
        %740 = vmatprep.subr.mxu0 0.0
        %741 = vmatpush1.msra.mxu0 0.0
        %742 = vmatprep.subr.mxu0 0.0
        %743 = vmatpush1.msra.mxu0 0.0
        %744 = vmatprep.subr.mxu0 0.0
        %745 = vmatpush1.msra.mxu0 0.0
        %746 = vmatprep.subr.mxu0 0.0
        %747 = vmatpush1.msra.mxu0 0.0
        %748 = vmatprep.subr.mxu0 0.0
        %749 = vmatpush1.msra.mxu0 0.0
        %750 = vmatprep.subr.mxu0 0.0
        %751 = vmatpush1.msra.mxu0 0.0
        %752 = vmatprep.subr.mxu0 0.0
        %753 = vmatpush1.msra.mxu0 0.0
        %754 = vmatprep.subr.mxu0 0.0
        %755 = vmatpush1.msra.mxu0 0.0
        %756 = vmatprep.mubr.f32.mxu0 0.0
        %757 = vmatmul.mubr.f32.gmra.mrb[0].mxu0 %v607
        %v758 = vpop.f32.mrb[0].mxu0
        %v759 = vadd.f32 0.0, %v758
        %v760 = vpop.f32.mrb[0].mxu0
        %761 = vmatprep.mubr.f32.mxu0 0.0
        %762 = vmatmul.mubr.f32.gmra.mrb[0].mxu0 %v610
        %v763 = vpop.f32.mrb[0].mxu0
        %v764 = vadd.f32 0.0, %v763
        %v765 = vpop.f32.mrb[0].mxu0
        %766 = vdwg.mxu0
        %v767 = vmax.f32 %v679, %v759
        %v768 = vmax.f32 %v684, %v764
        %v769 = vsub.f32 %v679, %v767
        %v770 = vsub.f32 %v684, %v768
        %v771 = vmul.f32 %v769, 1.442695
        %v772 = vpow.pop %v771
        %v773 = vmul.f32 %v770, 1.442695
        %v774 = vpow.pop %v773
        %v775 = vsub.f32 %v759, %v767
        %v776 = vsub.f32 %v764, %v768
        %v777 = vmul.f32 %v775, 1.442695
        %v778 = vpow.pop %v777
        %v779 = vmul.f32 %v776, 1.442695
        %v780 = vpow.pop %v779
        %v781 = vadd.f32 %v772, %v778
        %v782 = vadd.f32 %v774, %v780
        %vm783 = vcmp.eq.s32.totalorder %v595, 1
        %vm784 = vcmp.eq.s32.totalorder %v596, 1
        %v785 = vsel %vm783, %v759, 0.0
        %v786 = vsel %vm784, %v764, 0.0
        %v787 = vadd.f32 %v689, %v785
        %v788 = vadd.f32 %v690, %v786
        %v789 = vld [vmem:[#allocation2 + $0x10] sm:$0xff]
        %790 = vmatprep.subr.mxu0 0.0
        %791 = vmatpush1.msra.mxu0 %v789
        %792 = vmatprep.subr.mxu0 0.0
        %793 = vmatpush1.msra.mxu0 0.0
        %794 = vmatprep.subr.mxu0 0.0
        %795 = vmatpush1.msra.mxu0 0.0
        %796 = vmatprep.subr.mxu0 0.0
        %797 = vmatpush1.msra.mxu0 0.0
        %798 = vmatprep.subr.mxu0 0.0
        %799 = vmatpush1.msra.mxu0 0.0
        %800 = vmatprep.subr.mxu0 0.0
        %801 = vmatpush1.msra.mxu0 0.0
        %802 = vmatprep.subr.mxu0 0.0
        %803 = vmatpush1.msra.mxu0 0.0
        %804 = vmatprep.subr.mxu0 0.0
        %805 = vmatpush1.msra.mxu0 0.0
        %806 = vmatprep.subr.mxu0 0.0
        %807 = vmatpush1.msra.mxu0 0.0
        %808 = vmatprep.subr.mxu0 0.0
        %809 = vmatpush1.msra.mxu0 0.0
        %810 = vmatprep.subr.mxu0 0.0
        %811 = vmatpush1.msra.mxu0 0.0
        %812 = vmatprep.subr.mxu0 0.0
        %813 = vmatpush1.msra.mxu0 0.0
        %814 = vmatprep.subr.mxu0 0.0
        %815 = vmatpush1.msra.mxu0 0.0
        %816 = vmatprep.subr.mxu0 0.0
        %817 = vmatpush1.msra.mxu0 0.0
        %818 = vmatprep.subr.mxu0 0.0
        %819 = vmatpush1.msra.mxu0 0.0
        %820 = vmatprep.subr.mxu0 0.0
        %821 = vmatpush1.msra.mxu0 0.0
        %822 = vmatprep.subr.mxu0 0.0
        %823 = vmatpush1.msra.mxu0 0.0
        %824 = vmatprep.subr.mxu0 0.0
        %825 = vmatpush1.msra.mxu0 0.0
        %826 = vmatprep.subr.mxu0 0.0
        %827 = vmatpush1.msra.mxu0 0.0
        %828 = vmatprep.subr.mxu0 0.0
        %829 = vmatpush1.msra.mxu0 0.0
        %830 = vmatprep.subr.mxu0 0.0
        %831 = vmatpush1.msra.mxu0 0.0
        %832 = vmatprep.subr.mxu0 0.0
        %833 = vmatpush1.msra.mxu0 0.0
        %834 = vmatprep.subr.mxu0 0.0
        %835 = vmatpush1.msra.mxu0 0.0
        %836 = vmatprep.subr.mxu0 0.0
        %837 = vmatpush1.msra.mxu0 0.0
        %838 = vmatprep.subr.mxu0 0.0
        %839 = vmatpush1.msra.mxu0 0.0
        %840 = vmatprep.subr.mxu0 0.0
        %841 = vmatpush1.msra.mxu0 0.0
        %842 = vmatprep.subr.mxu0 0.0
        %843 = vmatpush1.msra.mxu0 0.0
        %844 = vmatprep.subr.mxu0 0.0
        %845 = vmatpush1.msra.mxu0 0.0
        %846 = vmatprep.subr.mxu0 0.0
        %847 = vmatpush1.msra.mxu0 0.0
        %848 = vmatprep.subr.mxu0 0.0
        %849 = vmatpush1.msra.mxu0 0.0
        %850 = vmatprep.subr.mxu0 0.0
        %851 = vmatpush1.msra.mxu0 0.0
        %852 = vmatprep.subr.mxu0 0.0
        %853 = vmatpush1.msra.mxu0 0.0
        %854 = vmatprep.mubr.f32.mxu0 0.0
        %855 = vmatmul.mubr.f32.gmra.mrb[0].mxu0 %v607
        %v856 = vpop.f32.mrb[0].mxu0
        %v857 = vadd.f32 0.0, %v856
        %v858 = vpop.f32.mrb[0].mxu0
        %859 = vmatprep.mubr.f32.mxu0 0.0
        %860 = vmatmul.mubr.f32.gmra.mrb[0].mxu0 %v610
        %v861 = vpop.f32.mrb[0].mxu0
        %v862 = vadd.f32 0.0, %v861
        %v863 = vpop.f32.mrb[0].mxu0
        %864 = vdwg.mxu0
        %v865 = vmax.f32 %v767, %v857
        %v866 = vmax.f32 %v768, %v862
        %v867 = vsub.f32 %v767, %v865
        %v868 = vsub.f32 %v768, %v866
        %v869 = vmul.f32 %v867, 1.442695
        %v870 = vpow.pop %v869
        %v871 = vmul.f32 %v868, 1.442695
        %v872 = vpow.pop %v871
        %v873 = vmul.f32 %v781, %v870
        %v874 = vmul.f32 %v782, %v872
        %v875 = vsub.f32 %v857, %v865
        %v876 = vsub.f32 %v862, %v866
        %v877 = vmul.f32 %v875, 1.442695
        %v878 = vpow.pop %v877
        %v879 = vmul.f32 %v876, 1.442695
        %v880 = vpow.pop %v879
        %v881 = vadd.f32 %v873, %v878
        %v882 = vadd.f32 %v874, %v880
        %vm883 = vcmp.eq.s32.totalorder %v595, 2
        %vm884 = vcmp.eq.s32.totalorder %v596, 2
        %v885 = vsel %vm883, %v857, 0.0
        %v886 = vsel %vm884, %v862, 0.0
        %v887 = vadd.f32 %v787, %v885
        %v888 = vadd.f32 %v788, %v886
        %v889 = vld [vmem:[#allocation2 + $0x18] sm:$0xff]
        %890 = vmatprep.subr.mxu0 0.0
        %891 = vmatpush1.msra.mxu0 %v889
        %892 = vmatprep.subr.mxu0 0.0
        %893 = vmatpush1.msra.mxu0 0.0
        %894 = vmatprep.subr.mxu0 0.0
        %895 = vmatpush1.msra.mxu0 0.0
        %896 = vmatprep.subr.mxu0 0.0
        %897 = vmatpush1.msra.mxu0 0.0
        %898 = vmatprep.subr.mxu0 0.0
        %899 = vmatpush1.msra.mxu0 0.0
        %900 = vmatprep.subr.mxu0 0.0
        %901 = vmatpush1.msra.mxu0 0.0
        %902 = vmatprep.subr.mxu0 0.0
        %903 = vmatpush1.msra.mxu0 0.0
        %904 = vmatprep.subr.mxu0 0.0
        %905 = vmatpush1.msra.mxu0 0.0
        %906 = vmatprep.subr.mxu0 0.0
        %907 = vmatpush1.msra.mxu0 0.0
        %908 = vmatprep.subr.mxu0 0.0
        %909 = vmatpush1.msra.mxu0 0.0
        %910 = vmatprep.subr.mxu0 0.0
        %911 = vmatpush1.msra.mxu0 0.0
        %912 = vmatprep.subr.mxu0 0.0
        %913 = vmatpush1.msra.mxu0 0.0
        %914 = vmatprep.subr.mxu0 0.0
        %915 = vmatpush1.msra.mxu0 0.0
        %916 = vmatprep.subr.mxu0 0.0
        %917 = vmatpush1.msra.mxu0 0.0
        %918 = vmatprep.subr.mxu0 0.0
        %919 = vmatpush1.msra.mxu0 0.0
        %920 = vmatprep.subr.mxu0 0.0
        %921 = vmatpush1.msra.mxu0 0.0
        %922 = vmatprep.subr.mxu0 0.0
        %923 = vmatpush1.msra.mxu0 0.0
        %924 = vmatprep.subr.mxu0 0.0
        %925 = vmatpush1.msra.mxu0 0.0
        %926 = vmatprep.subr.mxu0 0.0
        %927 = vmatpush1.msra.mxu0 0.0
        %928 = vmatprep.subr.mxu0 0.0
        %929 = vmatpush1.msra.mxu0 0.0
        %930 = vmatprep.subr.mxu0 0.0
        %931 = vmatpush1.msra.mxu0 0.0
        %932 = vmatprep.subr.mxu0 0.0
        %933 = vmatpush1.msra.mxu0 0.0
        %934 = vmatprep.subr.mxu0 0.0
        %935 = vmatpush1.msra.mxu0 0.0
        %936 = vmatprep.subr.mxu0 0.0
        %937 = vmatpush1.msra.mxu0 0.0
        %938 = vmatprep.subr.mxu0 0.0
        %939 = vmatpush1.msra.mxu0 0.0
        %940 = vmatprep.subr.mxu0 0.0
        %941 = vmatpush1.msra.mxu0 0.0
        %942 = vmatprep.subr.mxu0 0.0
        %943 = vmatpush1.msra.mxu0 0.0
        %944 = vmatprep.subr.mxu0 0.0
        %945 = vmatpush1.msra.mxu0 0.0
        %946 = vmatprep.subr.mxu0 0.0
        %947 = vmatpush1.msra.mxu0 0.0
        %948 = vmatprep.subr.mxu0 0.0
        %949 = vmatpush1.msra.mxu0 0.0
        %950 = vmatprep.subr.mxu0 0.0
        %951 = vmatpush1.msra.mxu0 0.0
        %952 = vmatprep.subr.mxu0 0.0
        %953 = vmatpush1.msra.mxu0 0.0
        %954 = vmatprep.mubr.f32.mxu0 0.0
        %955 = vmatmul.mubr.f32.gmra.mrb[0].mxu0 %v607
        %v956 = vpop.f32.mrb[0].mxu0
        %v957 = vadd.f32 0.0, %v956
        %v958 = vpop.f32.mrb[0].mxu0
        %959 = vmatprep.mubr.f32.mxu0 0.0
        %960 = vmatmul.mubr.f32.gmra.mrb[0].mxu0 %v610
        %v961 = vpop.f32.mrb[0].mxu0
        %v962 = vadd.f32 0.0, %v961
        %v963 = vpop.f32.mrb[0].mxu0
        %964 = vdwg.mxu0
        %v965 = vmax.f32 %v865, %v957
        %v966 = vmax.f32 %v866, %v962
        %v967 = vsub.f32 %v865, %v965
        %v968 = vsub.f32 %v866, %v966
        %v969 = vmul.f32 %v967, 1.442695
        %v970 = vpow.pop %v969
        %v971 = vmul.f32 %v968, 1.442695
        %v972 = vpow.pop %v971
        %v973 = vmul.f32 %v881, %v970
        %v974 = vmul.f32 %v882, %v972
        %v975 = vsub.f32 %v957, %v965
        %v976 = vsub.f32 %v962, %v966
        %v977 = vmul.f32 %v975, 1.442695
        %v978 = vpow.pop %v977
        %v979 = vmul.f32 %v976, 1.442695
        %v980 = vpow.pop %v979
        %v981 = vadd.f32 %v973, %v978
        %v982 = vadd.f32 %v974, %v980
        %vm983 = vcmp.eq.s32.totalorder %v595, 3
        %vm984 = vcmp.eq.s32.totalorder %v596, 3
        %v985 = vsel %vm983, %v957, 0.0
        %v986 = vsel %vm984, %v962, 0.0
        %v987 = vadd.f32 %v887, %v985
        %v988 = vadd.f32 %v888, %v986
        %v989 = vlog2.pop %v981
        %v990 = vmul.f32 %v989, 0.6931472
        %v991 = vlog2.pop %v982
        %v992 = vmul.f32 %v991, 0.6931472
        %v993 = vadd.f32 %v990, %v965
        %v994 = vadd.f32 %v992, %v966
        %v995 = vsub.f32 %v993, %v987
        %v996 = vsub.f32 %v994, %v988
        %v997 = vmul.f32 %v995, %v601
        %v998 = vmul.f32 %v996, %v602
        %v999 = vadd.f32 %v997, %v998
        %1000 = vadd.xlane.f32.xlu0 %v999
        %v1001 = vpop.xlane.xlu0 %1000
        %v1002 = vrot.slane %v1001, 4
        %v1003 = vadd.f32 %v1001, %v1002
        %v1004 = vrot.slane %v1003, 2
        %v1005 = vadd.f32 %v1003, %v1004
        %v1006 = vrot.slane %v1005, 1
        %v1007 = vadd.f32 %v1005, %v1006
        %s1008 = vtos %v1007
        %v1009 = vstv %s1008
        %v1010 = vadd.f32 %v603, %v1009
        %vm1011 = vcmask 0
        %1012 = vst.msk [vmem:[#allocation4] sm:$0x1] %vm1011, %v1010
        %v1013 = vld [vmem:[#allocation5] sm:$0x1]
        %v1014 = vld [vmem:[#allocation3] sm:$0xff]
        %1015 = vmatprep.subr.mxu0 0.0
        %1016 = vmatpush1.msra.mxu0 %v1014
        %1017 = vmatprep.subr.mxu0 0.0
        %1018 = vmatpush1.msra.mxu0 0.0
        %1019 = vmatprep.subr.mxu0 0.0
        %1020 = vmatpush1.msra.mxu0 0.0
        %1021 = vmatprep.subr.mxu0 0.0
        %1022 = vmatpush1.msra.mxu0 0.0
        %1023 = vmatprep.subr.mxu0 0.0
        %1024 = vmatpush1.msra.mxu0 0.0
        %1025 = vmatprep.subr.mxu0 0.0
        %1026 = vmatpush1.msra.mxu0 0.0
        %1027 = vmatprep.subr.mxu0 0.0
        %1028 = vmatpush1.msra.mxu0 0.0
        %1029 = vmatprep.subr.mxu0 0.0
        %1030 = vmatpush1.msra.mxu0 0.0
        %1031 = vmatprep.subr.mxu0 0.0
        %1032 = vmatpush1.msra.mxu0 0.0
        %1033 = vmatprep.subr.mxu0 0.0
        %1034 = vmatpush1.msra.mxu0 0.0
        %1035 = vmatprep.subr.mxu0 0.0
        %1036 = vmatpush1.msra.mxu0 0.0
        %1037 = vmatprep.subr.mxu0 0.0
        %1038 = vmatpush1.msra.mxu0 0.0
        %1039 = vmatprep.subr.mxu0 0.0
        %1040 = vmatpush1.msra.mxu0 0.0
        %1041 = vmatprep.subr.mxu0 0.0
        %1042 = vmatpush1.msra.mxu0 0.0
        %1043 = vmatprep.subr.mxu0 0.0
        %1044 = vmatpush1.msra.mxu0 0.0
        %1045 = vmatprep.subr.mxu0 0.0
        %1046 = vmatpush1.msra.mxu0 0.0
        %1047 = vmatprep.subr.mxu0 0.0
        %1048 = vmatpush1.msra.mxu0 0.0
        %1049 = vmatprep.subr.mxu0 0.0
        %1050 = vmatpush1.msra.mxu0 0.0
        %1051 = vmatprep.subr.mxu0 0.0
        %1052 = vmatpush1.msra.mxu0 0.0
        %1053 = vmatprep.subr.mxu0 0.0
        %1054 = vmatpush1.msra.mxu0 0.0
        %1055 = vmatprep.subr.mxu0 0.0
        %1056 = vmatpush1.msra.mxu0 0.0
        %1057 = vmatprep.subr.mxu0 0.0
        %1058 = vmatpush1.msra.mxu0 0.0
        %1059 = vmatprep.subr.mxu0 0.0
        %1060 = vmatpush1.msra.mxu0 0.0
        %1061 = vmatprep.subr.mxu0 0.0
        %1062 = vmatpush1.msra.mxu0 0.0
        %1063 = vmatprep.subr.mxu0 0.0
        %1064 = vmatpush1.msra.mxu0 0.0
        %1065 = vmatprep.subr.mxu0 0.0
        %1066 = vmatpush1.msra.mxu0 0.0
        %1067 = vmatprep.subr.mxu0 0.0
        %1068 = vmatpush1.msra.mxu0 0.0
        %1069 = vmatprep.subr.mxu0 0.0
        %1070 = vmatpush1.msra.mxu0 0.0
        %1071 = vmatprep.subr.mxu0 0.0
        %1072 = vmatpush1.msra.mxu0 0.0
        %1073 = vmatprep.subr.mxu0 0.0
        %1074 = vmatpush1.msra.mxu0 0.0
        %1075 = vmatprep.subr.mxu0 0.0
        %1076 = vmatpush1.msra.mxu0 0.0
        %1077 = vmatprep.subr.mxu0 0.0
        %1078 = vmatpush1.msra.mxu0 0.0
        %1079 = vmatprep.mubr.f32.mxu0 0.0
        %1080 = vmatmul.mubr.f32.gmra.mrb[0].mxu0 %v607
        %v1081 = vpop.f32.mrb[0].mxu0
        %v1082 = vadd.f32 0.0, %v1081
        %v1083 = vpop.f32.mrb[0].mxu0
        %1084 = vmatprep.mubr.f32.mxu0 0.0
        %1085 = vmatmul.mubr.f32.gmra.mrb[0].mxu0 %v610
        %v1086 = vpop.f32.mrb[0].mxu0
        %v1087 = vadd.f32 0.0, %v1086
        %v1088 = vpop.f32.mrb[0].mxu0
        %1089 = vdwg.mxu0
        %v1090 = vsel %vm687, %v1082, 0.0
        %v1091 = vsel %vm688, %v1087, 0.0
        %v1092 = vld [vmem:[#allocation3 + $0x8] sm:$0xff]
        %1093 = vmatprep.subr.mxu0 0.0
        %1094 = vmatpush1.msra.mxu0 %v1092
        %1095 = vmatprep.subr.mxu0 0.0
        %1096 = vmatpush1.msra.mxu0 0.0
        %1097 = vmatprep.subr.mxu0 0.0
        %1098 = vmatpush1.msra.mxu0 0.0
        %1099 = vmatprep.subr.mxu0 0.0
        %1100 = vmatpush1.msra.mxu0 0.0
        %1101 = vmatprep.subr.mxu0 0.0
        %1102 = vmatpush1.msra.mxu0 0.0
        %1103 = vmatprep.subr.mxu0 0.0
        %1104 = vmatpush1.msra.mxu0 0.0
        %1105 = vmatprep.subr.mxu0 0.0
        %1106 = vmatpush1.msra.mxu0 0.0
        %1107 = vmatprep.subr.mxu0 0.0
        %1108 = vmatpush1.msra.mxu0 0.0
        %1109 = vmatprep.subr.mxu0 0.0
        %1110 = vmatpush1.msra.mxu0 0.0
        %1111 = vmatprep.subr.mxu0 0.0
        %1112 = vmatpush1.msra.mxu0 0.0
        %1113 = vmatprep.subr.mxu0 0.0
        %1114 = vmatpush1.msra.mxu0 0.0
        %1115 = vmatprep.subr.mxu0 0.0
        %1116 = vmatpush1.msra.mxu0 0.0
        %1117 = vmatprep.subr.mxu0 0.0
        %1118 = vmatpush1.msra.mxu0 0.0
        %1119 = vmatprep.subr.mxu0 0.0
        %1120 = vmatpush1.msra.mxu0 0.0
        %1121 = vmatprep.subr.mxu0 0.0
        %1122 = vmatpush1.msra.mxu0 0.0
        %1123 = vmatprep.subr.mxu0 0.0
        %1124 = vmatpush1.msra.mxu0 0.0
        %1125 = vmatprep.subr.mxu0 0.0
        %1126 = vmatpush1.msra.mxu0 0.0
        %1127 = vmatprep.subr.mxu0 0.0
        %1128 = vmatpush1.msra.mxu0 0.0
        %1129 = vmatprep.subr.mxu0 0.0
        %1130 = vmatpush1.msra.mxu0 0.0
        %1131 = vmatprep.subr.mxu0 0.0
        %1132 = vmatpush1.msra.mxu0 0.0
        %1133 = vmatprep.subr.mxu0 0.0
        %1134 = vmatpush1.msra.mxu0 0.0
        %1135 = vmatprep.subr.mxu0 0.0
        %1136 = vmatpush1.msra.mxu0 0.0
        %1137 = vmatprep.subr.mxu0 0.0
        %1138 = vmatpush1.msra.mxu0 0.0
        %1139 = vmatprep.subr.mxu0 0.0
        %1140 = vmatpush1.msra.mxu0 0.0
        %1141 = vmatprep.subr.mxu0 0.0
        %1142 = vmatpush1.msra.mxu0 0.0
        %1143 = vmatprep.subr.mxu0 0.0
        %1144 = vmatpush1.msra.mxu0 0.0
        %1145 = vmatprep.subr.mxu0 0.0
        %1146 = vmatpush1.msra.mxu0 0.0
        %1147 = vmatprep.subr.mxu0 0.0
        %1148 = vmatpush1.msra.mxu0 0.0
        %1149 = vmatprep.subr.mxu0 0.0
        %1150 = vmatpush1.msra.mxu0 0.0
        %1151 = vmatprep.subr.mxu0 0.0
        %1152 = vmatpush1.msra.mxu0 0.0
        %1153 = vmatprep.subr.mxu0 0.0
        %1154 = vmatpush1.msra.mxu0 0.0
        %1155 = vmatprep.subr.mxu0 0.0
        %1156 = vmatpush1.msra.mxu0 0.0
        %1157 = vmatprep.mubr.f32.mxu0 0.0
        %1158 = vmatmul.mubr.f32.gmra.mrb[0].mxu0 %v607
        %v1159 = vpop.f32.mrb[0].mxu0
        %v1160 = vadd.f32 0.0, %v1159
        %v1161 = vpop.f32.mrb[0].mxu0
        %1162 = vmatprep.mubr.f32.mxu0 0.0
        %1163 = vmatmul.mubr.f32.gmra.mrb[0].mxu0 %v610
        %v1164 = vpop.f32.mrb[0].mxu0
        %v1165 = vadd.f32 0.0, %v1164
        %v1166 = vpop.f32.mrb[0].mxu0
        %1167 = vdwg.mxu0
        %v1168 = vmax.f32 %v1082, %v1160
        %v1169 = vmax.f32 %v1087, %v1165
        %v1170 = vsub.f32 %v1082, %v1168
        %v1171 = vsub.f32 %v1087, %v1169
        %v1172 = vmul.f32 %v1170, 1.442695
        %v1173 = vpow.pop %v1172
        %v1174 = vmul.f32 %v1171, 1.442695
        %v1175 = vpow.pop %v1174
        %v1176 = vsub.f32 %v1160, %v1168
        %v1177 = vsub.f32 %v1165, %v1169
        %v1178 = vmul.f32 %v1176, 1.442695
        %v1179 = vpow.pop %v1178
        %v1180 = vmul.f32 %v1177, 1.442695
        %v1181 = vpow.pop %v1180
        %v1182 = vadd.f32 %v1173, %v1179
        %v1183 = vadd.f32 %v1175, %v1181
        %v1184 = vsel %vm783, %v1160, 0.0
        %v1185 = vsel %vm784, %v1165, 0.0
        %v1186 = vadd.f32 %v1090, %v1184
        %v1187 = vadd.f32 %v1091, %v1185
        %v1188 = vld [vmem:[#allocation3 + $0x10] sm:$0xff]
        %1189 = vmatprep.subr.mxu0 0.0
        %1190 = vmatpush1.msra.mxu0 %v1188
        %1191 = vmatprep.subr.mxu0 0.0
        %1192 = vmatpush1.msra.mxu0 0.0
        %1193 = vmatprep.subr.mxu0 0.0
        %1194 = vmatpush1.msra.mxu0 0.0
        %1195 = vmatprep.subr.mxu0 0.0
        %1196 = vmatpush1.msra.mxu0 0.0
        %1197 = vmatprep.subr.mxu0 0.0
        %1198 = vmatpush1.msra.mxu0 0.0
        %1199 = vmatprep.subr.mxu0 0.0
        %1200 = vmatpush1.msra.mxu0 0.0
        %1201 = vmatprep.subr.mxu0 0.0
        %1202 = vmatpush1.msra.mxu0 0.0
        %1203 = vmatprep.subr.mxu0 0.0
        %1204 = vmatpush1.msra.mxu0 0.0
        %1205 = vmatprep.subr.mxu0 0.0
        %1206 = vmatpush1.msra.mxu0 0.0
        %1207 = vmatprep.subr.mxu0 0.0
        %1208 = vmatpush1.msra.mxu0 0.0
        %1209 = vmatprep.subr.mxu0 0.0
        %1210 = vmatpush1.msra.mxu0 0.0
        %1211 = vmatprep.subr.mxu0 0.0
        %1212 = vmatpush1.msra.mxu0 0.0
        %1213 = vmatprep.subr.mxu0 0.0
        %1214 = vmatpush1.msra.mxu0 0.0
        %1215 = vmatprep.subr.mxu0 0.0
        %1216 = vmatpush1.msra.mxu0 0.0
        %1217 = vmatprep.subr.mxu0 0.0
        %1218 = vmatpush1.msra.mxu0 0.0
        %1219 = vmatprep.subr.mxu0 0.0
        %1220 = vmatpush1.msra.mxu0 0.0
        %1221 = vmatprep.subr.mxu0 0.0
        %1222 = vmatpush1.msra.mxu0 0.0
        %1223 = vmatprep.subr.mxu0 0.0
        %1224 = vmatpush1.msra.mxu0 0.0
        %1225 = vmatprep.subr.mxu0 0.0
        %1226 = vmatpush1.msra.mxu0 0.0
        %1227 = vmatprep.subr.mxu0 0.0
        %1228 = vmatpush1.msra.mxu0 0.0
        %1229 = vmatprep.subr.mxu0 0.0
        %1230 = vmatpush1.msra.mxu0 0.0
        %1231 = vmatprep.subr.mxu0 0.0
        %1232 = vmatpush1.msra.mxu0 0.0
        %1233 = vmatprep.subr.mxu0 0.0
        %1234 = vmatpush1.msra.mxu0 0.0
        %1235 = vmatprep.subr.mxu0 0.0
        %1236 = vmatpush1.msra.mxu0 0.0
        %1237 = vmatprep.subr.mxu0 0.0
        %1238 = vmatpush1.msra.mxu0 0.0
        %1239 = vmatprep.subr.mxu0 0.0
        %1240 = vmatpush1.msra.mxu0 0.0
        %1241 = vmatprep.subr.mxu0 0.0
        %1242 = vmatpush1.msra.mxu0 0.0
        %1243 = vmatprep.subr.mxu0 0.0
        %1244 = vmatpush1.msra.mxu0 0.0
        %1245 = vmatprep.subr.mxu0 0.0
        %1246 = vmatpush1.msra.mxu0 0.0
        %1247 = vmatprep.subr.mxu0 0.0
        %1248 = vmatpush1.msra.mxu0 0.0
        %1249 = vmatprep.subr.mxu0 0.0
        %1250 = vmatpush1.msra.mxu0 0.0
        %1251 = vmatprep.subr.mxu0 0.0
        %1252 = vmatpush1.msra.mxu0 0.0
        %1253 = vmatprep.mubr.f32.mxu0 0.0
        %1254 = vmatmul.mubr.f32.gmra.mrb[0].mxu0 %v607
        %v1255 = vpop.f32.mrb[0].mxu0
        %v1256 = vadd.f32 0.0, %v1255
        %v1257 = vpop.f32.mrb[0].mxu0
        %1258 = vmatprep.mubr.f32.mxu0 0.0
        %1259 = vmatmul.mubr.f32.gmra.mrb[0].mxu0 %v610
        %v1260 = vpop.f32.mrb[0].mxu0
        %v1261 = vadd.f32 0.0, %v1260
        %v1262 = vpop.f32.mrb[0].mxu0
        %1263 = vdwg.mxu0
        %v1264 = vmax.f32 %v1168, %v1256
        %v1265 = vmax.f32 %v1169, %v1261
        %v1266 = vsub.f32 %v1168, %v1264
        %v1267 = vsub.f32 %v1169, %v1265
        %v1268 = vmul.f32 %v1266, 1.442695
        %v1269 = vpow.pop %v1268
        %v1270 = vmul.f32 %v1267, 1.442695
        %v1271 = vpow.pop %v1270
        %v1272 = vmul.f32 %v1182, %v1269
        %v1273 = vmul.f32 %v1183, %v1271
        %v1274 = vsub.f32 %v1256, %v1264
        %v1275 = vsub.f32 %v1261, %v1265
        %v1276 = vmul.f32 %v1274, 1.442695
        %v1277 = vpow.pop %v1276
        %v1278 = vmul.f32 %v1275, 1.442695
        %v1279 = vpow.pop %v1278
        %v1280 = vadd.f32 %v1272, %v1277
        %v1281 = vadd.f32 %v1273, %v1279
        %v1282 = vsel %vm883, %v1256, 0.0
        %v1283 = vsel %vm884, %v1261, 0.0
        %v1284 = vadd.f32 %v1186, %v1282
        %v1285 = vadd.f32 %v1187, %v1283
        %v1286 = vld [vmem:[#allocation3 + $0x18] sm:$0xff]
        %1287 = vmatprep.subr.mxu0 0.0
        %1288 = vmatpush1.msra.mxu0 %v1286
        %1289 = vmatprep.subr.mxu0 0.0
        %1290 = vmatpush1.msra.mxu0 0.0
        %1291 = vmatprep.subr.mxu0 0.0
        %1292 = vmatpush1.msra.mxu0 0.0
        %1293 = vmatprep.subr.mxu0 0.0
        %1294 = vmatpush1.msra.mxu0 0.0
        %1295 = vmatprep.subr.mxu0 0.0
        %1296 = vmatpush1.msra.mxu0 0.0
        %1297 = vmatprep.subr.mxu0 0.0
        %1298 = vmatpush1.msra.mxu0 0.0
        %1299 = vmatprep.subr.mxu0 0.0
        %1300 = vmatpush1.msra.mxu0 0.0
        %1301 = vmatprep.subr.mxu0 0.0
        %1302 = vmatpush1.msra.mxu0 0.0
        %1303 = vmatprep.subr.mxu0 0.0
        %1304 = vmatpush1.msra.mxu0 0.0
        %1305 = vmatprep.subr.mxu0 0.0
        %1306 = vmatpush1.msra.mxu0 0.0
        %1307 = vmatprep.subr.mxu0 0.0
        %1308 = vmatpush1.msra.mxu0 0.0
        %1309 = vmatprep.subr.mxu0 0.0
        %1310 = vmatpush1.msra.mxu0 0.0
        %1311 = vmatprep.subr.mxu0 0.0
        %1312 = vmatpush1.msra.mxu0 0.0
        %1313 = vmatprep.subr.mxu0 0.0
        %1314 = vmatpush1.msra.mxu0 0.0
        %1315 = vmatprep.subr.mxu0 0.0
        %1316 = vmatpush1.msra.mxu0 0.0
        %1317 = vmatprep.subr.mxu0 0.0
        %1318 = vmatpush1.msra.mxu0 0.0
        %1319 = vmatprep.subr.mxu0 0.0
        %1320 = vmatpush1.msra.mxu0 0.0
        %1321 = vmatprep.subr.mxu0 0.0
        %1322 = vmatpush1.msra.mxu0 0.0
        %1323 = vmatprep.subr.mxu0 0.0
        %1324 = vmatpush1.msra.mxu0 0.0
        %1325 = vmatprep.subr.mxu0 0.0
        %1326 = vmatpush1.msra.mxu0 0.0
        %1327 = vmatprep.subr.mxu0 0.0
        %1328 = vmatpush1.msra.mxu0 0.0
        %1329 = vmatprep.subr.mxu0 0.0
        %1330 = vmatpush1.msra.mxu0 0.0
        %1331 = vmatprep.subr.mxu0 0.0
        %1332 = vmatpush1.msra.mxu0 0.0
        %1333 = vmatprep.subr.mxu0 0.0
        %1334 = vmatpush1.msra.mxu0 0.0
        %1335 = vmatprep.subr.mxu0 0.0
        %1336 = vmatpush1.msra.mxu0 0.0
        %1337 = vmatprep.subr.mxu0 0.0
        %1338 = vmatpush1.msra.mxu0 0.0
        %1339 = vmatprep.subr.mxu0 0.0
        %1340 = vmatpush1.msra.mxu0 0.0
        %1341 = vmatprep.subr.mxu0 0.0
        %1342 = vmatpush1.msra.mxu0 0.0
        %1343 = vmatprep.subr.mxu0 0.0
        %1344 = vmatpush1.msra.mxu0 0.0
        %1345 = vmatprep.subr.mxu0 0.0
        %1346 = vmatpush1.msra.mxu0 0.0
        %1347 = vmatprep.subr.mxu0 0.0
        %1348 = vmatpush1.msra.mxu0 0.0
        %1349 = vmatprep.subr.mxu0 0.0
        %1350 = vmatpush1.msra.mxu0 0.0
        %1351 = vmatprep.mubr.f32.mxu0 0.0
        %1352 = vmatmul.mubr.f32.gmra.mrb[0].mxu0 %v607
        %v1353 = vpop.f32.mrb[0].mxu0
        %v1354 = vadd.f32 0.0, %v1353
        %v1355 = vpop.f32.mrb[0].mxu0
        %1356 = vmatprep.mubr.f32.mxu0 0.0
        %1357 = vmatmul.mubr.f32.gmra.mrb[0].mxu0 %v610
        %v1358 = vpop.f32.mrb[0].mxu0
        %v1359 = vadd.f32 0.0, %v1358
        %v1360 = vpop.f32.mrb[0].mxu0
        %1361 = vdwg.mxu0
        %v1362 = vmax.f32 %v1264, %v1354
        %v1363 = vmax.f32 %v1265, %v1359
        %v1364 = vsub.f32 %v1264, %v1362
        %v1365 = vsub.f32 %v1265, %v1363
        %v1366 = vmul.f32 %v1364, 1.442695
        %v1367 = vpow.pop %v1366
        %v1368 = vmul.f32 %v1365, 1.442695
        %v1369 = vpow.pop %v1368
        %v1370 = vmul.f32 %v1280, %v1367
        %v1371 = vmul.f32 %v1281, %v1369
        %v1372 = vsub.f32 %v1354, %v1362
        %v1373 = vsub.f32 %v1359, %v1363
        %v1374 = vmul.f32 %v1372, 1.442695
        %v1375 = vpow.pop %v1374
        %v1376 = vmul.f32 %v1373, 1.442695
        %v1377 = vpow.pop %v1376
        %v1378 = vadd.f32 %v1370, %v1375
        %v1379 = vadd.f32 %v1371, %v1377
        %v1380 = vsel %vm983, %v1354, 0.0
        %v1381 = vsel %vm984, %v1359, 0.0
        %v1382 = vadd.f32 %v1284, %v1380
        %v1383 = vadd.f32 %v1285, %v1381
        %v1384 = vlog2.pop %v1378
        %v1385 = vmul.f32 %v1384, 0.6931472
        %v1386 = vlog2.pop %v1379
        %v1387 = vmul.f32 %v1386, 0.6931472
        %v1388 = vadd.f32 %v1385, %v1362
        %v1389 = vadd.f32 %v1387, %v1363
        %v1390 = vsub.f32 %v1388, %v1382
        %v1391 = vsub.f32 %v1389, %v1383
        %v1392 = vmul.f32 %v1390, %v601
        %v1393 = vmul.f32 %v1391, %v602
        %v1394 = vadd.f32 %v1392, %v1393
        %1395 = vadd.xlane.f32.xlu0 %v1394
        %v1396 = vpop.xlane.xlu0 %1395
        %v1397 = vrot.slane %v1396, 4
        %v1398 = vadd.f32 %v1396, %v1397
        %v1399 = vrot.slane %v1398, 2
        %v1400 = vadd.f32 %v1398, %v1399
        %v1401 = vrot.slane %v1400, 1
        %v1402 = vadd.f32 %v1400, %v1401
        %s1403 = vtos %v1402
        %v1404 = vstv %s1403
        %v1405 = vadd.f32 %v1013, %v1404
        %1406 = vst.msk [vmem:[#allocation5] sm:$0x1] %vm1011, %v1405
        %v1407 = vld [vmem:[#allocation6] sm:$0x1]
        %v1408 = vadd.f32 %v601, %v602
        %1409 = vadd.xlane.f32.xlu0 %v1408
        %v1410 = vpop.xlane.xlu0 %1409
        %v1411 = vrot.slane %v1410, 4
        %v1412 = vadd.f32 %v1410, %v1411
        %v1413 = vrot.slane %v1412, 2
        %v1414 = vadd.f32 %v1412, %v1413
        %v1415 = vrot.slane %v1414, 1
        %v1416 = vadd.f32 %v1414, %v1415
        %s1417 = vtos %v1416
        %v1418 = vstv %s1417
        %v1419 = vadd.f32 %v1407, %v1418
        %1420 = vst.msk [vmem:[#allocation6] sm:$0x1] %vm1011, %v1419
        // Predicated region
        $region65: #{tpu_custom_call.1} parent=39 // pred_check
          %p1421 = pneg %p373
        $region66: #{tpu_custom_call.1} parent=39 // pred_check_branch
          %1423 = sbr.rel (%p1421) target = $region68
        $region67: #{tpu_custom_call.1} parent=39 // pred_region
          %v1424 = vlaneseq
          %v1425 = vshrl.u32 %v1424, 7
          %vm1426 = vcmp.eq.s32.totalorder %v1425, 0
          %v1427 = vld [vmem:[#allocation4] sm:$0x1]
          %vm1428 = vcmp.eq.s32.totalorder %v1425, 1
          %v1429 = vld [vmem:[#allocation5] sm:$0x1]
          %vm1430 = vcmp.eq.s32.totalorder %v1425, 2
          %v1431 = vld [vmem:[#allocation6] sm:$0x1]
          %v1433 = vlaneseq
          %v1434 = vshrl.u32 %v1433, 7
          %v1435 = vsub.s32 0, %v1434
          %v1436 = vrot.slane %v1431, %v1435
          %1437 = vset.pattern.permute.xlu0 0
          %1438 = vperm.xlu0 %1437, %v1436
          %v1439 = vpop.permute.xlu0 %1438
          %v1441 = vsel %vm1430, %v1439, 0.0
          %v1443 = vlaneseq
          %v1444 = vshrl.u32 %v1443, 7
          %v1445 = vsub.s32 0, %v1444
          %v1446 = vrot.slane %v1429, %v1445
          %1447 = vset.pattern.permute.xlu0 0
          %1448 = vperm.xlu0 %1447, %v1446
          %v1449 = vpop.permute.xlu0 %1448
          %v1451 = vsel %vm1428, %v1449, %v1441
          %v1453 = vlaneseq
          %v1454 = vshrl.u32 %v1453, 7
          %v1455 = vsub.s32 0, %v1454
          %v1456 = vrot.slane %v1427, %v1455
          %1457 = vset.pattern.permute.xlu0 0
          %1458 = vperm.xlu0 %1457, %v1456
          %v1459 = vpop.permute.xlu0 %1458
          %v1461 = vsel %vm1426, %v1459, %v1451
          %1462 = vst [vmem:[%s370] sm:$0xff] %v1461
        $region68: #{tpu_custom_call.1} parent=39 // pred_fallthru
          _
        %s1463 = sand.u32 %s173, 1
        %s1464 = scalar_lea.sflag [#allocation9], %s1463
        %s1465 = sand.u32 %s173, 1
        %s1466 = smul.addr %s1465, 8
        %s1467 = scalar_lea.vmem [#allocation16], %s1466
        // Predicated region
        $region69: #{tpu_custom_call.1} parent=39 // pred_check
          %p1468 = pneg %p183
        $region70: #{tpu_custom_call.1} parent=39 // pred_check_branch
          %1470 = sbr.rel (%p1468) target = $region72
        $region71: #{tpu_custom_call.1} parent=39 // pred_region
          %s1472 = ssub.s32 128, 128
          %1473 = vsyncadd %s1464, %s1472
          %s1474 = smul.addr %s30, 128
          %s1475 = scalar_lea.hbm %s5, %s1474
          %s1477 = sshll.u32 %s1467, 4
          %s1478 = int_to_ptr.vmem [resolvable:$true] %s1477
          %1480 = dma.vmem_to_hbm [thread:$0]  %s1478, 128, %s1475, %s1464
        $region72: #{tpu_custom_call.1} parent=39 // pred_fallthru
          _
      $region40: #{tpu_custom_call.1} parent=5 // pred_fallthru
        _
      %p1481 = scmp.le.s32.totalorder 2, %s21
      // Predicated region
      $region73: #{tpu_custom_call.1} parent=5 // pred_check
        %p1482 = pneg %p1481
      $region74: #{tpu_custom_call.1} parent=5 // pred_check_branch
        %1484 = sbr.rel (%p1482) target = $region76
      $region75: #{tpu_custom_call.1} parent=5 // pred_region
        %s1485 = ssub.s32 %s21, 2
        // Predicated region
        $region77: #{tpu_custom_call.1} parent=75 // pred_check
          %p1486 = pneg %p189
        $region78: #{tpu_custom_call.1} parent=75 // pred_check_branch
          %1488 = sbr.rel (%p1486) target = $region80
        $region79: #{tpu_custom_call.1} parent=75 // pred_region
          %s1489 = sand.u32 %s174, 1
          %s1490 = scalar_lea.sflag [#allocation9], %s1489
          %s1491 = sand.u32 %s174, 1
          %s1492 = smul.addr %s1491, 8
          %s1493 = scalar_lea.vmem [#allocation16], %s1492
          %1494 = dma.done %s1490, 128
        $region80: #{tpu_custom_call.1} parent=75 // pred_fallthru
          _
      $region76: #{tpu_custom_call.1} parent=5 // pred_fallthru
        _
    $region6: #{tpu_custom_call.1} parent=1 // loop_footer
      %s25 = sadd.s32 1, %s21
    $region7: #{tpu_custom_call.1} parent=1 // loop_footer_branch
      %20 = sbr.rel target = $region3
    $region8: #{tpu_custom_call.1} parent=1 // loop_exit
      _
    %1495 = vsyncpa [#allocation8], 1
    %s1496 = scalar_lea.sflag [#allocation8], 1
    %1497 = vsyncpa %s1496, 1
    %1498 = vsyncpa [#allocation11], 1
    %s1499 = scalar_lea.sflag [#allocation11], 1
    %1500 = vsyncpa %s1499, 1
    %1501 = vsyncpa [#allocation14], 1
    %1502 = vsyncpa [#allocation9], 1
    %s1503 = scalar_lea.sflag [#allocation9], 1
    %1504 = vsyncpa %s1503, 1

</llo_original>
